<compile_context>
chip_gen: v7x
topology: tpu7x:2x2x1
jax: 0.10.0
libtpu: 0.0.40
codegen_flags: <defaults>
</compile_context>

<pallas_src>
import functools

import jax
import jax.numpy as jnp
from jax import lax
from jax.experimental import pallas as pl
from jax.experimental.pallas import tpu as pltpu

BN_EPS = 1e-5


def _pick_row_tile(hout, wout, cap=16):
    """Output-row tile per image s.t. Hout % t == 0 and (t*Wout) % 8 == 0 (sublane rule)."""
    for d in range(min(hout, cap), 0, -1):
        if hout % d == 0 and (d * wout) % 8 == 0:
            return d
    raise ValueError(f"unsupported output shape Hout={hout}, Wout={wout}")


def _pick_tr(rows, wc, vmem_budget=8 * 2**20):
    """Row tile for the elementwise pass: divisor of `rows`, multiple of 8 (or full),
    capped so ~6 live (tr, wc) f32 buffers stay inside `vmem_budget`."""
    cap = max(8, vmem_budget // (6 * wc * 4))
    cap = min(rows, cap)
    for d in range(cap, 0, -1):
        if rows % d == 0 and (d % 8 == 0 or d == rows):
            return d
    return rows


def _conv_stats_kernel(xs_ref, w_ref, conv_ref, stat_ref, *, tho, wout, cout):
    """One tile of `tho` output rows: conv (4 accumulated MXU matmuls / row) + BN partial stats."""
    # shift-grouped weights (4, 4*Cin, Cout), bf16; index s = dh*2 + dw  (hoisted out of the loop)
    w00 = w_ref[0]
    w01 = w_ref[1]
    w10 = w_ref[2]
    w11 = w_ref[3]

    s1 = jnp.zeros((wout, cout), jnp.float32)
    s2 = jnp.zeros((wout, cout), jnp.float32)
    for r in range(tho):  # static unroll, tho <= 16
        acc = jnp.dot(xs_ref[r, 0:wout, :], w00, preferred_element_type=jnp.float32)
        acc += jnp.dot(xs_ref[r, 1:wout + 1, :], w01, preferred_element_type=jnp.float32)
        acc += jnp.dot(xs_ref[r + 1, 0:wout, :], w10, preferred_element_type=jnp.float32)
        acc += jnp.dot(xs_ref[r + 1, 1:wout + 1, :], w11, preferred_element_type=jnp.float32)
        conv_ref[r * wout:(r + 1) * wout, :] = acc
        s1 = s1 + acc
        s2 = s2 + acc * acc

    # per-tile partial stats (row 0: sum, row 1: sum of squares) -> no resident accumulator,
    # so the whole grid axis stays "parallel" (megacore-shardable on v7x).
    stat_ref[...] = jnp.zeros_like(stat_ref)
    stat_ref[0:1, :] = jnp.sum(s1, axis=0, keepdims=True)
    stat_ref[1:2, :] = jnp.sum(s2, axis=0, keepdims=True)


def _bn_relu_kernel(conv_ref, scale_ref, shift_ref, out_ref):
    # single FMA + ReLU, lane-dense layout
    out_ref[...] = jnp.maximum(conv_ref[...] * scale_ref[...] + shift_ref[...], 0.0)


def down_conv_forward(x_nchw, weight_oihw, gamma, beta):
    """x: (N, Cin, H, W) f32, weight: (Cout, Cin, 3, 3) f32, gamma/beta: (Cout,) f32."""
    N, Cin, H, W = x_nchw.shape
    Cout = weight_oihw.shape[0]
    Hout = (H + 2 - 3) // 2 + 1
    Wout = (W + 2 - 3) // 2 + 1
    Hp, Wp = Hout + 1, Wout + 1
    K4 = 4 * Cin
    M = N * Hout * Wout

    tho = _pick_row_tile(Hout, Wout)      # output rows per grid step (per image)
    n_hb = Hout // tho
    G = N * n_hb                          # grid size of pass 1

    # ---- glue: layout only (no conv arithmetic), bf16 to halve input HBM traffic ----
    x = jnp.transpose(x_nchw, (0, 2, 3, 1)).astype(jnp.bfloat16)            # NHWC
    pad_h = 2 * Hp - (H + 2)
    pad_w = 2 * Wp - (W + 2)
    x_pad = jnp.pad(x, ((0, 0), (1, 1 + pad_h), (1, 1 + pad_w), (0, 0)))    # (N, 2Hp, 2Wp, Cin)
    # space-to-depth: xs[n, i, j, (ph*2+pw)*Cin + c] = x_pad[n, 2i+ph, 2j+pw, c]
    xs = (x_pad.reshape(N, Hp, 2, Wp, 2, Cin)
               .transpose(0, 1, 3, 2, 4, 5)
               .reshape(N, Hp, Wp, K4))
    # row tiles with a 1-row halo so BlockSpec streams non-overlapping blocks
    row_idx = jnp.arange(n_hb)[:, None] * tho + jnp.arange(tho + 1)[None, :]
    xs_blocks = xs[:, row_idx].reshape(G * (tho + 1), Wp, K4)

    # shift-grouped weights: w4[dh*2+dw, (ph*2+pw)*Cin + c, o] = W[o,c,2dh+ph,2dw+pw] (0 if tap > 2)
    w9 = jnp.transpose(weight_oihw, (2, 3, 1, 0))                           # (3,3,Cin,Cout)
    w9 = jnp.pad(w9, ((0, 1), (0, 1), (0, 0), (0, 0)))                      # (4,4,Cin,Cout)
    w4 = (w9.reshape(2, 2, 2, 2, Cin, Cout)
             .transpose(0, 2, 1, 3, 4, 5)
             .reshape(4, K4, Cout)
             .astype(jnp.bfloat16))

    # ---- pass 1: conv tiles + per-tile partial channel sum / sum-of-squares ----
    conv_block = tho * Wout
    kern1 = functools.partial(_conv_stats_kernel, tho=tho, wout=Wout, cout=Cout)
    step_bytes = 2 * ((tho + 1) * Wp * K4 * 2 + conv_block * Cout * 4
                      + 8 * Cout * 4 + 4 * K4 * Cout * 2)
    vmem1 = int(min(48 * 2**20, max(32 * 2**20, 3 * step_bytes)))  # <= 48 MiB: safe on v7x too
    conv, stats = pl.pallas_call(
        kern1,
        out_shape=(
            jax.ShapeDtypeStruct((M, Cout), jnp.float32),
            jax.ShapeDtypeStruct((G * 8, Cout), jnp.float32),
        ),
        grid=(G,),
        in_specs=[
            pl.BlockSpec((tho + 1, Wp, K4), lambda g: (g, 0, 0)),
            pl.BlockSpec((4, K4, Cout), lambda g: (0, 0, 0)),
        ],
        out_specs=(
            pl.BlockSpec((conv_block, Cout), lambda g: (g, 0)),
            pl.BlockSpec((8, Cout), lambda g: (g, 0)),
        ),
        compiler_params=pltpu.CompilerParams(
            dimension_semantics=("parallel",),           # per-tile outputs -> megacore-shardable
            vmem_limit_bytes=vmem1),
        cost_estimate=pl.CostEstimate(
            flops=2 * M * 4 * K4 * Cout,
            transcendentals=0,
            bytes_accessed=(xs_blocks.size * 2 + w4.size * 2
                            + M * Cout * 4 + G * 8 * Cout * 4)),
    )(xs_blocks, w4)

    # ---- BN fold (Cout elements, negligible): biased batch variance, train mode ----
    stats = stats.reshape(G, 8, Cout)
    csum = jnp.sum(stats[:, 0, :], axis=0)
    csq = jnp.sum(stats[:, 1, :], axis=0)
    mean = csum / M
    var = jnp.maximum(csq / M - mean * mean, 0.0)
    scale = gamma * lax.rsqrt(var + BN_EPS)
    shift = beta - mean * scale
    # TODO(synk): BatchNorm running_mean/running_var momentum update is a training-time
    # buffer side effect that does not affect the returned tensor; omitted.

    # ---- pass 2: fused scale/shift + ReLU on a lane-dense (N*Hout, Wout*Cout) view ----
    R = N * Hout
    WC = Wout * Cout
    conv2 = conv.reshape(R, WC)                          # flat-order-preserving (free) reshape
    scale_row = jnp.tile(scale, Wout).reshape(1, WC).astype(jnp.float32)
    shift_row = jnp.tile(shift, Wout).reshape(1, WC).astype(jnp.float32)
    tr = _pick_tr(R, WC)
    vmem2 = int(min(48 * 2**20, max(32 * 2**20, 6 * tr * WC * 4)))
    out2 = pl.pallas_call(
        _bn_relu_kernel,
        out_shape=jax.ShapeDtypeStruct((R, WC), jnp.float32),
        grid=(R // tr,),
        in_specs=[
            pl.BlockSpec((tr, WC), lambda i: (i, 0)),
            pl.BlockSpec((1, WC), lambda i: (0, 0)),
            pl.BlockSpec((1, WC), lambda i: (0, 0)),
        ],
        out_specs=pl.BlockSpec((tr, WC), lambda i: (i, 0)),
        compiler_params=pltpu.CompilerParams(
            dimension_semantics=("parallel",),           # megacore-shardable elementwise pass
            vmem_limit_bytes=vmem2),
        cost_estimate=pl.CostEstimate(
            flops=3 * M * Cout,
            transcendentals=0,
            bytes_accessed=2 * M * Cout * 4 + 2 * WC * 4),
    )(conv2, scale_row, shift_row)

    out = out2.reshape(N, Hout, Wout, Cout)
    return jnp.transpose(out, (0, 3, 1, 2))              # back to NCHW


def _reference(x, weight, gamma, beta):
    conv = lax.conv_general_dilated(
        x, weight, window_strides=(2, 2), padding=((1, 1), (1, 1)),
        dimension_numbers=("NCHW", "OIHW", "NCHW"))
    mean = jnp.mean(conv, axis=(0, 2, 3), keepdims=True)
    var = jnp.var(conv, axis=(0, 2, 3), keepdims=True)
    y = (conv - mean) * lax.rsqrt(var + BN_EPS)
    y = y * gamma.reshape(1, -1, 1, 1) + beta.reshape(1, -1, 1, 1)
    return jnp.maximum(y, 0.0)


if __name__ == "__main__":
    key = jax.random.PRNGKey(0)
    k_x, k_w, k_g, k_b = jax.random.split(key, 4)

    N, Cin, H, W = 2, 4, 16, 16
    Cout = 8

    x = jax.random.normal(k_x, (N, Cin, H, W), dtype=jnp.float32)
    weight = jax.random.normal(k_w, (Cout, Cin, 3, 3), dtype=jnp.float32) * 0.1
    gamma = 1.0 + 0.5 * jax.random.normal(k_g, (Cout,), dtype=jnp.float32)
    beta = 0.1 * jax.random.normal(k_b, (Cout,), dtype=jnp.float32)

    fwd = jax.jit(down_conv_forward)
    out = jax.block_until_ready(fwd(x, weight, gamma, beta))
    assert out.shape == (N, Cout, H // 2, W // 2), out.shape

    # Tight check: reference fed the same bf16-rounded conv operands the kernel uses
    # (the kernel feeds bf16 to the MXU with f32 accumulation).
    x_bf = x.astype(jnp.bfloat16).astype(jnp.float32)
    w_bf = weight.astype(jnp.bfloat16).astype(jnp.float32)
    ref = jax.block_until_ready(_reference(x_bf, w_bf, gamma, beta))
    assert jnp.allclose(out, ref, atol=2e-3, rtol=2e-3), float(jnp.max(jnp.abs(out - ref)))

    # Loose sanity check against the full-f32 module (bf16 operand rounding is ~1e-2 level).
    ref32 = jax.block_until_ready(_reference(x, weight, gamma, beta))
    assert jnp.allclose(out, ref32, atol=5e-2, rtol=5e-2), float(jnp.max(jnp.abs(out - ref32)))

    print("KERNEL_OK")
</pallas_src>

<mosaic_0001>
module attributes {stable_mosaic.version = 11 : i64} {
  func.func @_conv_stats_kernel(%arg0: i32, %arg1: memref<9x9x16xbf16, #tpu.memory_space<vmem>>, %arg2: memref<4x16x8xbf16, #tpu.memory_space<vmem>>, %arg3: memref<64x8xf32, #tpu.memory_space<vmem>>, %arg4: memref<8x8xf32, #tpu.memory_space<vmem>>) attributes {dimension_semantics = [#tpu.dimension_semantics<parallel>], iteration_bounds = array<i64: 2>, scalar_prefetch = 0 : i64, scratch_operands = 0 : i64, tpu.core_type = #tpu.core_type<tc>, window_params = [{transform_indices = @transform_0, window_bounds = array<i64: 9, 9, 16>}, {pipeline_mode = #tpu.pipeline_mode<synchronous>, transform_indices = @transform_1, window_bounds = array<i64: 4, 16, 8>}, {transform_indices = @transform_2, window_bounds = array<i64: 64, 8>}, {transform_indices = @transform_3, window_bounds = array<i64: 8, 8>}]} {
    %c0 = arith.constant 0 : index
    %c0_0 = arith.constant 0 : index
    %c0_1 = arith.constant 0 : index
    %0 = vector.load %arg2[%c0, %c0_0, %c0_1] : memref<4x16x8xbf16, #tpu.memory_space<vmem>>, vector<1x16x8xbf16>
    %1 = vector.shape_cast %0 : vector<1x16x8xbf16> to vector<16x8xbf16>
    %c1 = arith.constant 1 : index
    %c0_2 = arith.constant 0 : index
    %c0_3 = arith.constant 0 : index
    %2 = vector.load %arg2[%c1, %c0_2, %c0_3] : memref<4x16x8xbf16, #tpu.memory_space<vmem>>, vector<1x16x8xbf16>
    %3 = vector.shape_cast %2 : vector<1x16x8xbf16> to vector<16x8xbf16>
    %c2 = arith.constant 2 : index
    %c0_4 = arith.constant 0 : index
    %c0_5 = arith.constant 0 : index
    %4 = vector.load %arg2[%c2, %c0_4, %c0_5] : memref<4x16x8xbf16, #tpu.memory_space<vmem>>, vector<1x16x8xbf16>
    %5 = vector.shape_cast %4 : vector<1x16x8xbf16> to vector<16x8xbf16>
    %c3 = arith.constant 3 : index
    %c0_6 = arith.constant 0 : index
    %c0_7 = arith.constant 0 : index
    %6 = vector.load %arg2[%c3, %c0_6, %c0_7] : memref<4x16x8xbf16, #tpu.memory_space<vmem>>, vector<1x16x8xbf16>
    %7 = vector.shape_cast %6 : vector<1x16x8xbf16> to vector<16x8xbf16>
    %cst = arith.constant 0.000000e+00 : f32
    %8 = vector.broadcast %cst : f32 to vector<8x8xf32>
    %cst_8 = arith.constant 0.000000e+00 : f32
    %9 = vector.broadcast %cst_8 : f32 to vector<8x8xf32>
    %c0_9 = arith.constant 0 : index
    %c0_10 = arith.constant 0 : index
    %c0_11 = arith.constant 0 : index
    %10 = vector.load %arg1[%c0_9, %c0_10, %c0_11] : memref<9x9x16xbf16, #tpu.memory_space<vmem>>, vector<1x8x16xbf16>
    %11 = vector.shape_cast %10 : vector<1x8x16xbf16> to vector<8x16xbf16>
    %cst_12 = arith.constant dense<0.000000e+00> : vector<8x8xf32>
    %12 = tpu.matmul %11, %1, %cst_12 {dimension_numbers = #tpu.dot_dimension_numbers<[1], [0], [0], [1], [0, 0, 1, 1], [], []>} : vector<8x16xbf16>, vector<16x8xbf16>, vector<8x8xf32> -> vector<8x8xf32>
    %c0_13 = arith.constant 0 : index
    %c1_14 = arith.constant 1 : index
    %c0_15 = arith.constant 0 : index
    %13 = vector.load %arg1[%c0_13, %c1_14, %c0_15] : memref<9x9x16xbf16, #tpu.memory_space<vmem>>, vector<1x8x16xbf16>
    %14 = vector.shape_cast %13 : vector<1x8x16xbf16> to vector<8x16xbf16>
    %cst_16 = arith.constant dense<0.000000e+00> : vector<8x8xf32>
    %15 = tpu.matmul %14, %3, %cst_16 {dimension_numbers = #tpu.dot_dimension_numbers<[1], [0], [0], [1], [0, 0, 1, 1], [], []>} : vector<8x16xbf16>, vector<16x8xbf16>, vector<8x8xf32> -> vector<8x8xf32>
    %16 = arith.addf %12, %15 : vector<8x8xf32>
    %c1_17 = arith.constant 1 : index
    %c0_18 = arith.constant 0 : index
    %c0_19 = arith.constant 0 : index
    %17 = vector.load %arg1[%c1_17, %c0_18, %c0_19] : memref<9x9x16xbf16, #tpu.memory_space<vmem>>, vector<1x8x16xbf16>
    %18 = vector.shape_cast %17 : vector<1x8x16xbf16> to vector<8x16xbf16>
    %cst_20 = arith.constant dense<0.000000e+00> : vector<8x8xf32>
    %19 = tpu.matmul %18, %5, %cst_20 {dimension_numbers = #tpu.dot_dimension_numbers<[1], [0], [0], [1], [0, 0, 1, 1], [], []>} : vector<8x16xbf16>, vector<16x8xbf16>, vector<8x8xf32> -> vector<8x8xf32>
    %20 = arith.addf %16, %19 : vector<8x8xf32>
    %c1_21 = arith.constant 1 : index
    %c1_22 = arith.constant 1 : index
    %c0_23 = arith.constant 0 : index
    %21 = vector.load %arg1[%c1_21, %c1_22, %c0_23] : memref<9x9x16xbf16, #tpu.memory_space<vmem>>, vector<1x8x16xbf16>
    %22 = vector.shape_cast %21 : vector<1x8x16xbf16> to vector<8x16xbf16>
    %cst_24 = arith.constant dense<0.000000e+00> : vector<8x8xf32>
    %23 = tpu.matmul %22, %7, %cst_24 {dimension_numbers = #tpu.dot_dimension_numbers<[1], [0], [0], [1], [0, 0, 1, 1], [], []>} : vector<8x16xbf16>, vector<16x8xbf16>, vector<8x8xf32> -> vector<8x8xf32>
    %24 = arith.addf %20, %23 : vector<8x8xf32>
    %c0_25 = arith.constant 0 : index
    %c0_26 = arith.constant 0 : index
    %25 = vector.load %arg3[%c0_25, %c0_26] : memref<64x8xf32, #tpu.memory_space<vmem>>, vector<8x8xf32>
    tpu.vector_store %arg3[%c0_25, %c0_26], %24 {strides = array<i32>} : memref<64x8xf32, #tpu.memory_space<vmem>>, vector<8x8xf32>,
    %26 = arith.addf %8, %24 : vector<8x8xf32>
    %27 = arith.mulf %24, %24 : vector<8x8xf32>
    %28 = arith.addf %9, %27 : vector<8x8xf32>
    %c1_27 = arith.constant 1 : index
    %c0_28 = arith.constant 0 : index
    %c0_29 = arith.constant 0 : index
    %29 = vector.load %arg1[%c1_27, %c0_28, %c0_29] : memref<9x9x16xbf16, #tpu.memory_space<vmem>>, vector<1x8x16xbf16>
    %30 = vector.shape_cast %29 : vector<1x8x16xbf16> to vector<8x16xbf16>
    %cst_30 = arith.constant dense<0.000000e+00> : vector<8x8xf32>
    %31 = tpu.matmul %30, %1, %cst_30 {dimension_numbers = #tpu.dot_dimension_numbers<[1], [0], [0], [1], [0, 0, 1, 1], [], []>} : vector<8x16xbf16>, vector<16x8xbf16>, vector<8x8xf32> -> vector<8x8xf32>
    %c1_31 = arith.constant 1 : index
    %c1_32 = arith.constant 1 : index
    %c0_33 = arith.constant 0 : index
    %32 = vector.load %arg1[%c1_31, %c1_32, %c0_33] : memref<9x9x16xbf16, #tpu.memory_space<vmem>>, vector<1x8x16xbf16>
    %33 = vector.shape_cast %32 : vector<1x8x16xbf16> to vector<8x16xbf16>
    %cst_34 = arith.constant dense<0.000000e+00> : vector<8x8xf32>
    %34 = tpu.matmul %33, %3, %cst_34 {dimension_numbers = #tpu.dot_dimension_numbers<[1], [0], [0], [1], [0, 0, 1, 1], [], []>} : vector<8x16xbf16>, vector<16x8xbf16>, vector<8x8xf32> -> vector<8x8xf32>
    %35 = arith.addf %31, %34 : vector<8x8xf32>
    %c2_35 = arith.constant 2 : index
    %c0_36 = arith.constant 0 : index
    %c0_37 = arith.constant 0 : index
    %36 = vector.load %arg1[%c2_35, %c0_36, %c0_37] : memref<9x9x16xbf16, #tpu.memory_space<vmem>>, vector<1x8x16xbf16>
    %37 = vector.shape_cast %36 : vector<1x8x16xbf16> to vector<8x16xbf16>
    %cst_38 = arith.constant dense<0.000000e+00> : vector<8x8xf32>
    %38 = tpu.matmul %37, %5, %cst_38 {dimension_numbers = #tpu.dot_dimension_numbers<[1], [0], [0], [1], [0, 0, 1, 1], [], []>} : vector<8x16xbf16>, vector<16x8xbf16>, vector<8x8xf32> -> vector<8x8xf32>
    %39 = arith.addf %35, %38 : vector<8x8xf32>
    %c2_39 = arith.constant 2 : index
    %c1_40 = arith.constant 1 : index
    %c0_41 = arith.constant 0 : index
    %40 = vector.load %arg1[%c2_39, %c1_40, %c0_41] : memref<9x9x16xbf16, #tpu.memory_space<vmem>>, vector<1x8x16xbf16>
    %41 = vector.shape_cast %40 : vector<1x8x16xbf16> to vector<8x16xbf16>
    %cst_42 = arith.constant dense<0.000000e+00> : vector<8x8xf32>
    %42 = tpu.matmul %41, %7, %cst_42 {dimension_numbers = #tpu.dot_dimension_numbers<[1], [0], [0], [1], [0, 0, 1, 1], [], []>} : vector<8x16xbf16>, vector<16x8xbf16>, vector<8x8xf32> -> vector<8x8xf32>
    %43 = arith.addf %39, %42 : vector<8x8xf32>
    %c8 = arith.constant 8 : index
    %c0_43 = arith.constant 0 : index
    %44 = vector.load %arg3[%c8, %c0_43] : memref<64x8xf32, #tpu.memory_space<vmem>>, vector<8x8xf32>
    tpu.vector_store %arg3[%c8, %c0_43], %43 {strides = array<i32>} : memref<64x8xf32, #tpu.memory_space<vmem>>, vector<8x8xf32>,
    %45 = arith.addf %26, %43 : vector<8x8xf32>
    %46 = arith.mulf %43, %43 : vector<8x8xf32>
    %47 = arith.addf %28, %46 : vector<8x8xf32>
    %c2_44 = arith.constant 2 : index
    %c0_45 = arith.constant 0 : index
    %c0_46 = arith.constant 0 : index
    %48 = vector.load %arg1[%c2_44, %c0_45, %c0_46] : memref<9x9x16xbf16, #tpu.memory_space<vmem>>, vector<1x8x16xbf16>
    %49 = vector.shape_cast %48 : vector<1x8x16xbf16> to vector<8x16xbf16>
    %cst_47 = arith.constant dense<0.000000e+00> : vector<8x8xf32>
    %50 = tpu.matmul %49, %1, %cst_47 {dimension_numbers = #tpu.dot_dimension_numbers<[1], [0], [0], [1], [0, 0, 1, 1], [], []>} : vector<8x16xbf16>, vector<16x8xbf16>, vector<8x8xf32> -> vector<8x8xf32>
    %c2_48 = arith.constant 2 : index
    %c1_49 = arith.constant 1 : index
    %c0_50 = arith.constant 0 : index
    %51 = vector.load %arg1[%c2_48, %c1_49, %c0_50] : memref<9x9x16xbf16, #tpu.memory_space<vmem>>, vector<1x8x16xbf16>
    %52 = vector.shape_cast %51 : vector<1x8x16xbf16> to vector<8x16xbf16>
    %cst_51 = arith.constant dense<0.000000e+00> : vector<8x8xf32>
    %53 = tpu.matmul %52, %3, %cst_51 {dimension_numbers = #tpu.dot_dimension_numbers<[1], [0], [0], [1], [0, 0, 1, 1], [], []>} : vector<8x16xbf16>, vector<16x8xbf16>, vector<8x8xf32> -> vector<8x8xf32>
    %54 = arith.addf %50, %53 : vector<8x8xf32>
    %c3_52 = arith.constant 3 : index
    %c0_53 = arith.constant 0 : index
    %c0_54 = arith.constant 0 : index
    %55 = vector.load %arg1[%c3_52, %c0_53, %c0_54] : memref<9x9x16xbf16, #tpu.memory_space<vmem>>, vector<1x8x16xbf16>
    %56 = vector.shape_cast %55 : vector<1x8x16xbf16> to vector<8x16xbf16>
    %cst_55 = arith.constant dense<0.000000e+00> : vector<8x8xf32>
    %57 = tpu.matmul %56, %5, %cst_55 {dimension_numbers = #tpu.dot_dimension_numbers<[1], [0], [0], [1], [0, 0, 1, 1], [], []>} : vector<8x16xbf16>, vector<16x8xbf16>, vector<8x8xf32> -> vector<8x8xf32>
    %58 = arith.addf %54, %57 : vector<8x8xf32>
    %c3_56 = arith.constant 3 : index
    %c1_57 = arith.constant 1 : index
    %c0_58 = arith.constant 0 : index
    %59 = vector.load %arg1[%c3_56, %c1_57, %c0_58] : memref<9x9x16xbf16, #tpu.memory_space<vmem>>, vector<1x8x16xbf16>
    %60 = vector.shape_cast %59 : vector<1x8x16xbf16> to vector<8x16xbf16>
    %cst_59 = arith.constant dense<0.000000e+00> : vector<8x8xf32>
    %61 = tpu.matmul %60, %7, %cst_59 {dimension_numbers = #tpu.dot_dimension_numbers<[1], [0], [0], [1], [0, 0, 1, 1], [], []>} : vector<8x16xbf16>, vector<16x8xbf16>, vector<8x8xf32> -> vector<8x8xf32>
    %62 = arith.addf %58, %61 : vector<8x8xf32>
    %c16 = arith.constant 16 : index
    %c0_60 = arith.constant 0 : index
    %63 = vector.load %arg3[%c16, %c0_60] : memref<64x8xf32, #tpu.memory_space<vmem>>, vector<8x8xf32>
    tpu.vector_store %arg3[%c16, %c0_60], %62 {strides = array<i32>} : memref<64x8xf32, #tpu.memory_space<vmem>>, vector<8x8xf32>,
    %64 = arith.addf %45, %62 : vector<8x8xf32>
    %65 = arith.mulf %62, %62 : vector<8x8xf32>
    %66 = arith.addf %47, %65 : vector<8x8xf32>
    %c3_61 = arith.constant 3 : index
    %c0_62 = arith.constant 0 : index
    %c0_63 = arith.constant 0 : index
    %67 = vector.load %arg1[%c3_61, %c0_62, %c0_63] : memref<9x9x16xbf16, #tpu.memory_space<vmem>>, vector<1x8x16xbf16>
    %68 = vector.shape_cast %67 : vector<1x8x16xbf16> to vector<8x16xbf16>
    %cst_64 = arith.constant dense<0.000000e+00> : vector<8x8xf32>
    %69 = tpu.matmul %68, %1, %cst_64 {dimension_numbers = #tpu.dot_dimension_numbers<[1], [0], [0], [1], [0, 0, 1, 1], [], []>} : vector<8x16xbf16>, vector<16x8xbf16>, vector<8x8xf32> -> vector<8x8xf32>
    %c3_65 = arith.constant 3 : index
    %c1_66 = arith.constant 1 : index
    %c0_67 = arith.constant 0 : index
    %70 = vector.load %arg1[%c3_65, %c1_66, %c0_67] : memref<9x9x16xbf16, #tpu.memory_space<vmem>>, vector<1x8x16xbf16>
    %71 = vector.shape_cast %70 : vector<1x8x16xbf16> to vector<8x16xbf16>
    %cst_68 = arith.constant dense<0.000000e+00> : vector<8x8xf32>
    %72 = tpu.matmul %71, %3, %cst_68 {dimension_numbers = #tpu.dot_dimension_numbers<[1], [0], [0], [1], [0, 0, 1, 1], [], []>} : vector<8x16xbf16>, vector<16x8xbf16>, vector<8x8xf32> -> vector<8x8xf32>
    %73 = arith.addf %69, %72 : vector<8x8xf32>
    %c4 = arith.constant 4 : index
    %c0_69 = arith.constant 0 : index
    %c0_70 = arith.constant 0 : index
    %74 = vector.load %arg1[%c4, %c0_69, %c0_70] : memref<9x9x16xbf16, #tpu.memory_space<vmem>>, vector<1x8x16xbf16>
    %75 = vector.shape_cast %74 : vector<1x8x16xbf16> to vector<8x16xbf16>
    %cst_71 = arith.constant dense<0.000000e+00> : vector<8x8xf32>
    %76 = tpu.matmul %75, %5, %cst_71 {dimension_numbers = #tpu.dot_dimension_numbers<[1], [0], [0], [1], [0, 0, 1, 1], [], []>} : vector<8x16xbf16>, vector<16x8xbf16>, vector<8x8xf32> -> vector<8x8xf32>
    %77 = arith.addf %73, %76 : vector<8x8xf32>
    %c4_72 = arith.constant 4 : index
    %c1_73 = arith.constant 1 : index
    %c0_74 = arith.constant 0 : index
    %78 = vector.load %arg1[%c4_72, %c1_73, %c0_74] : memref<9x9x16xbf16, #tpu.memory_space<vmem>>, vector<1x8x16xbf16>
    %79 = vector.shape_cast %78 : vector<1x8x16xbf16> to vector<8x16xbf16>
    %cst_75 = arith.constant dense<0.000000e+00> : vector<8x8xf32>
    %80 = tpu.matmul %79, %7, %cst_75 {dimension_numbers = #tpu.dot_dimension_numbers<[1], [0], [0], [1], [0, 0, 1, 1], [], []>} : vector<8x16xbf16>, vector<16x8xbf16>, vector<8x8xf32> -> vector<8x8xf32>
    %81 = arith.addf %77, %80 : vector<8x8xf32>
    %c24 = arith.constant 24 : index
    %c0_76 = arith.constant 0 : index
    %82 = vector.load %arg3[%c24, %c0_76] : memref<64x8xf32, #tpu.memory_space<vmem>>, vector<8x8xf32>
    tpu.vector_store %arg3[%c24, %c0_76], %81 {strides = array<i32>} : memref<64x8xf32, #tpu.memory_space<vmem>>, vector<8x8xf32>,
    %83 = arith.addf %64, %81 : vector<8x8xf32>
    %84 = arith.mulf %81, %81 : vector<8x8xf32>
    %85 = arith.addf %66, %84 : vector<8x8xf32>
    %c4_77 = arith.constant 4 : index
    %c0_78 = arith.constant 0 : index
    %c0_79 = arith.constant 0 : index
    %86 = vector.load %arg1[%c4_77, %c0_78, %c0_79] : memref<9x9x16xbf16, #tpu.memory_space<vmem>>, vector<1x8x16xbf16>
    %87 = vector.shape_cast %86 : vector<1x8x16xbf16> to vector<8x16xbf16>
    %cst_80 = arith.constant dense<0.000000e+00> : vector<8x8xf32>
    %88 = tpu.matmul %87, %1, %cst_80 {dimension_numbers = #tpu.dot_dimension_numbers<[1], [0], [0], [1], [0, 0, 1, 1], [], []>} : vector<8x16xbf16>, vector<16x8xbf16>, vector<8x8xf32> -> vector<8x8xf32>
    %c4_81 = arith.constant 4 : index
    %c1_82 = arith.constant 1 : index
    %c0_83 = arith.constant 0 : index
    %89 = vector.load %arg1[%c4_81, %c1_82, %c0_83] : memref<9x9x16xbf16, #tpu.memory_space<vmem>>, vector<1x8x16xbf16>
    %90 = vector.shape_cast %89 : vector<1x8x16xbf16> to vector<8x16xbf16>
    %cst_84 = arith.constant dense<0.000000e+00> : vector<8x8xf32>
    %91 = tpu.matmul %90, %3, %cst_84 {dimension_numbers = #tpu.dot_dimension_numbers<[1], [0], [0], [1], [0, 0, 1, 1], [], []>} : vector<8x16xbf16>, vector<16x8xbf16>, vector<8x8xf32> -> vector<8x8xf32>
    %92 = arith.addf %88, %91 : vector<8x8xf32>
    %c5 = arith.constant 5 : index
    %c0_85 = arith.constant 0 : index
    %c0_86 = arith.constant 0 : index
    %93 = vector.load %arg1[%c5, %c0_85, %c0_86] : memref<9x9x16xbf16, #tpu.memory_space<vmem>>, vector<1x8x16xbf16>
    %94 = vector.shape_cast %93 : vector<1x8x16xbf16> to vector<8x16xbf16>
    %cst_87 = arith.constant dense<0.000000e+00> : vector<8x8xf32>
    %95 = tpu.matmul %94, %5, %cst_87 {dimension_numbers = #tpu.dot_dimension_numbers<[1], [0], [0], [1], [0, 0, 1, 1], [], []>} : vector<8x16xbf16>, vector<16x8xbf16>, vector<8x8xf32> -> vector<8x8xf32>
    %96 = arith.addf %92, %95 : vector<8x8xf32>
    %c5_88 = arith.constant 5 : index
    %c1_89 = arith.constant 1 : index
    %c0_90 = arith.constant 0 : index
    %97 = vector.load %arg1[%c5_88, %c1_89, %c0_90] : memref<9x9x16xbf16, #tpu.memory_space<vmem>>, vector<1x8x16xbf16>
    %98 = vector.shape_cast %97 : vector<1x8x16xbf16> to vector<8x16xbf16>
    %cst_91 = arith.constant dense<0.000000e+00> : vector<8x8xf32>
    %99 = tpu.matmul %98, %7, %cst_91 {dimension_numbers = #tpu.dot_dimension_numbers<[1], [0], [0], [1], [0, 0, 1, 1], [], []>} : vector<8x16xbf16>, vector<16x8xbf16>, vector<8x8xf32> -> vector<8x8xf32>
    %100 = arith.addf %96, %99 : vector<8x8xf32>
    %c32 = arith.constant 32 : index
    %c0_92 = arith.constant 0 : index
    %101 = vector.load %arg3[%c32, %c0_92] : memref<64x8xf32, #tpu.memory_space<vmem>>, vector<8x8xf32>
    tpu.vector_store %arg3[%c32, %c0_92], %100 {strides = array<i32>} : memref<64x8xf32, #tpu.memory_space<vmem>>, vector<8x8xf32>,
    %102 = arith.addf %83, %100 : vector<8x8xf32>
    %103 = arith.mulf %100, %100 : vector<8x8xf32>
    %104 = arith.addf %85, %103 : vector<8x8xf32>
    %c5_93 = arith.constant 5 : index
    %c0_94 = arith.constant 0 : index
    %c0_95 = arith.constant 0 : index
    %105 = vector.load %arg1[%c5_93, %c0_94, %c0_95] : memref<9x9x16xbf16, #tpu.memory_space<vmem>>, vector<1x8x16xbf16>
    %106 = vector.shape_cast %105 : vector<1x8x16xbf16> to vector<8x16xbf16>
    %cst_96 = arith.constant dense<0.000000e+00> : vector<8x8xf32>
    %107 = tpu.matmul %106, %1, %cst_96 {dimension_numbers = #tpu.dot_dimension_numbers<[1], [0], [0], [1], [0, 0, 1, 1], [], []>} : vector<8x16xbf16>, vector<16x8xbf16>, vector<8x8xf32> -> vector<8x8xf32>
    %c5_97 = arith.constant 5 : index
    %c1_98 = arith.constant 1 : index
    %c0_99 = arith.constant 0 : index
    %108 = vector.load %arg1[%c5_97, %c1_98, %c0_99] : memref<9x9x16xbf16, #tpu.memory_space<vmem>>, vector<1x8x16xbf16>
    %109 = vector.shape_cast %108 : vector<1x8x16xbf16> to vector<8x16xbf16>
    %cst_100 = arith.constant dense<0.000000e+00> : vector<8x8xf32>
    %110 = tpu.matmul %109, %3, %cst_100 {dimension_numbers = #tpu.dot_dimension_numbers<[1], [0], [0], [1], [0, 0, 1, 1], [], []>} : vector<8x16xbf16>, vector<16x8xbf16>, vector<8x8xf32> -> vector<8x8xf32>
    %111 = arith.addf %107, %110 : vector<8x8xf32>
    %c6 = arith.constant 6 : index
    %c0_101 = arith.constant 0 : index
    %c0_102 = arith.constant 0 : index
    %112 = vector.load %arg1[%c6, %c0_101, %c0_102] : memref<9x9x16xbf16, #tpu.memory_space<vmem>>, vector<1x8x16xbf16>
    %113 = vector.shape_cast %112 : vector<1x8x16xbf16> to vector<8x16xbf16>
    %cst_103 = arith.constant dense<0.000000e+00> : vector<8x8xf32>
    %114 = tpu.matmul %113, %5, %cst_103 {dimension_numbers = #tpu.dot_dimension_numbers<[1], [0], [0], [1], [0, 0, 1, 1], [], []>} : vector<8x16xbf16>, vector<16x8xbf16>, vector<8x8xf32> -> vector<8x8xf32>
    %115 = arith.addf %111, %114 : vector<8x8xf32>
    %c6_104 = arith.constant 6 : index
    %c1_105 = arith.constant 1 : index
    %c0_106 = arith.constant 0 : index
    %116 = vector.load %arg1[%c6_104, %c1_105, %c0_106] : memref<9x9x16xbf16, #tpu.memory_space<vmem>>, vector<1x8x16xbf16>
    %117 = vector.shape_cast %116 : vector<1x8x16xbf16> to vector<8x16xbf16>
    %cst_107 = arith.constant dense<0.000000e+00> : vector<8x8xf32>
    %118 = tpu.matmul %117, %7, %cst_107 {dimension_numbers = #tpu.dot_dimension_numbers<[1], [0], [0], [1], [0, 0, 1, 1], [], []>} : vector<8x16xbf16>, vector<16x8xbf16>, vector<8x8xf32> -> vector<8x8xf32>
    %119 = arith.addf %115, %118 : vector<8x8xf32>
    %c40 = arith.constant 40 : index
    %c0_108 = arith.constant 0 : index
    %120 = vector.load %arg3[%c40, %c0_108] : memref<64x8xf32, #tpu.memory_space<vmem>>, vector<8x8xf32>
    tpu.vector_store %arg3[%c40, %c0_108], %119 {strides = array<i32>} : memref<64x8xf32, #tpu.memory_space<vmem>>, vector<8x8xf32>,
    %121 = arith.addf %102, %119 : vector<8x8xf32>
    %122 = arith.mulf %119, %119 : vector<8x8xf32>
    %123 = arith.addf %104, %122 : vector<8x8xf32>
    %c6_109 = arith.constant 6 : index
    %c0_110 = arith.constant 0 : index
    %c0_111 = arith.constant 0 : index
    %124 = vector.load %arg1[%c6_109, %c0_110, %c0_111] : memref<9x9x16xbf16, #tpu.memory_space<vmem>>, vector<1x8x16xbf16>
    %125 = vector.shape_cast %124 : vector<1x8x16xbf16> to vector<8x16xbf16>
    %cst_112 = arith.constant dense<0.000000e+00> : vector<8x8xf32>
    %126 = tpu.matmul %125, %1, %cst_112 {dimension_numbers = #tpu.dot_dimension_numbers<[1], [0], [0], [1], [0, 0, 1, 1], [], []>} : vector<8x16xbf16>, vector<16x8xbf16>, vector<8x8xf32> -> vector<8x8xf32>
    %c6_113 = arith.constant 6 : index
    %c1_114 = arith.constant 1 : index
    %c0_115 = arith.constant 0 : index
    %127 = vector.load %arg1[%c6_113, %c1_114, %c0_115] : memref<9x9x16xbf16, #tpu.memory_space<vmem>>, vector<1x8x16xbf16>
    %128 = vector.shape_cast %127 : vector<1x8x16xbf16> to vector<8x16xbf16>
    %cst_116 = arith.constant dense<0.000000e+00> : vector<8x8xf32>
    %129 = tpu.matmul %128, %3, %cst_116 {dimension_numbers = #tpu.dot_dimension_numbers<[1], [0], [0], [1], [0, 0, 1, 1], [], []>} : vector<8x16xbf16>, vector<16x8xbf16>, vector<8x8xf32> -> vector<8x8xf32>
    %130 = arith.addf %126, %129 : vector<8x8xf32>
    %c7 = arith.constant 7 : index
    %c0_117 = arith.constant 0 : index
    %c0_118 = arith.constant 0 : index
    %131 = vector.load %arg1[%c7, %c0_117, %c0_118] : memref<9x9x16xbf16, #tpu.memory_space<vmem>>, vector<1x8x16xbf16>
    %132 = vector.shape_cast %131 : vector<1x8x16xbf16> to vector<8x16xbf16>
    %cst_119 = arith.constant dense<0.000000e+00> : vector<8x8xf32>
    %133 = tpu.matmul %132, %5, %cst_119 {dimension_numbers = #tpu.dot_dimension_numbers<[1], [0], [0], [1], [0, 0, 1, 1], [], []>} : vector<8x16xbf16>, vector<16x8xbf16>, vector<8x8xf32> -> vector<8x8xf32>
    %134 = arith.addf %130, %133 : vector<8x8xf32>
    %c7_120 = arith.constant 7 : index
    %c1_121 = arith.constant 1 : index
    %c0_122 = arith.constant 0 : index
    %135 = vector.load %arg1[%c7_120, %c1_121, %c0_122] : memref<9x9x16xbf16, #tpu.memory_space<vmem>>, vector<1x8x16xbf16>
    %136 = vector.shape_cast %135 : vector<1x8x16xbf16> to vector<8x16xbf16>
    %cst_123 = arith.constant dense<0.000000e+00> : vector<8x8xf32>
    %137 = tpu.matmul %136, %7, %cst_123 {dimension_numbers = #tpu.dot_dimension_numbers<[1], [0], [0], [1], [0, 0, 1, 1], [], []>} : vector<8x16xbf16>, vector<16x8xbf16>, vector<8x8xf32> -> vector<8x8xf32>
    %138 = arith.addf %134, %137 : vector<8x8xf32>
    %c48 = arith.constant 48 : index
    %c0_124 = arith.constant 0 : index
    %139 = vector.load %arg3[%c48, %c0_124] : memref<64x8xf32, #tpu.memory_space<vmem>>, vector<8x8xf32>
    tpu.vector_store %arg3[%c48, %c0_124], %138 {strides = array<i32>} : memref<64x8xf32, #tpu.memory_space<vmem>>, vector<8x8xf32>,
    %140 = arith.addf %121, %138 : vector<8x8xf32>
    %141 = arith.mulf %138, %138 : vector<8x8xf32>
    %142 = arith.addf %123, %141 : vector<8x8xf32>
    %c7_125 = arith.constant 7 : index
    %c0_126 = arith.constant 0 : index
    %c0_127 = arith.constant 0 : index
    %143 = vector.load %arg1[%c7_125, %c0_126, %c0_127] : memref<9x9x16xbf16, #tpu.memory_space<vmem>>, vector<1x8x16xbf16>
    %144 = vector.shape_cast %143 : vector<1x8x16xbf16> to vector<8x16xbf16>
    %cst_128 = arith.constant dense<0.000000e+00> : vector<8x8xf32>
    %145 = tpu.matmul %144, %1, %cst_128 {dimension_numbers = #tpu.dot_dimension_numbers<[1], [0], [0], [1], [0, 0, 1, 1], [], []>} : vector<8x16xbf16>, vector<16x8xbf16>, vector<8x8xf32> -> vector<8x8xf32>
    %c7_129 = arith.constant 7 : index
    %c1_130 = arith.constant 1 : index
    %c0_131 = arith.constant 0 : index
    %146 = vector.load %arg1[%c7_129, %c1_130, %c0_131] : memref<9x9x16xbf16, #tpu.memory_space<vmem>>, vector<1x8x16xbf16>
    %147 = vector.shape_cast %146 : vector<1x8x16xbf16> to vector<8x16xbf16>
    %cst_132 = arith.constant dense<0.000000e+00> : vector<8x8xf32>
    %148 = tpu.matmul %147, %3, %cst_132 {dimension_numbers = #tpu.dot_dimension_numbers<[1], [0], [0], [1], [0, 0, 1, 1], [], []>} : vector<8x16xbf16>, vector<16x8xbf16>, vector<8x8xf32> -> vector<8x8xf32>
    %149 = arith.addf %145, %148 : vector<8x8xf32>
    %c8_133 = arith.constant 8 : index
    %c0_134 = arith.constant 0 : index
    %c0_135 = arith.constant 0 : index
    %150 = vector.load %arg1[%c8_133, %c0_134, %c0_135] : memref<9x9x16xbf16, #tpu.memory_space<vmem>>, vector<1x8x16xbf16>
    %151 = vector.shape_cast %150 : vector<1x8x16xbf16> to vector<8x16xbf16>
    %cst_136 = arith.constant dense<0.000000e+00> : vector<8x8xf32>
    %152 = tpu.matmul %151, %5, %cst_136 {dimension_numbers = #tpu.dot_dimension_numbers<[1], [0], [0], [1], [0, 0, 1, 1], [], []>} : vector<8x16xbf16>, vector<16x8xbf16>, vector<8x8xf32> -> vector<8x8xf32>
    %153 = arith.addf %149, %152 : vector<8x8xf32>
    %c8_137 = arith.constant 8 : index
    %c1_138 = arith.constant 1 : index
    %c0_139 = arith.constant 0 : index
    %154 = vector.load %arg1[%c8_137, %c1_138, %c0_139] : memref<9x9x16xbf16, #tpu.memory_space<vmem>>, vector<1x8x16xbf16>
    %155 = vector.shape_cast %154 : vector<1x8x16xbf16> to vector<8x16xbf16>
    %cst_140 = arith.constant dense<0.000000e+00> : vector<8x8xf32>
    %156 = tpu.matmul %155, %7, %cst_140 {dimension_numbers = #tpu.dot_dimension_numbers<[1], [0], [0], [1], [0, 0, 1, 1], [], []>} : vector<8x16xbf16>, vector<16x8xbf16>, vector<8x8xf32> -> vector<8x8xf32>
    %157 = arith.addf %153, %156 : vector<8x8xf32>
    %c56 = arith.constant 56 : index
    %c0_141 = arith.constant 0 : index
    %158 = vector.load %arg3[%c56, %c0_141] : memref<64x8xf32, #tpu.memory_space<vmem>>, vector<8x8xf32>
    tpu.vector_store %arg3[%c56, %c0_141], %157 {strides = array<i32>} : memref<64x8xf32, #tpu.memory_space<vmem>>, vector<8x8xf32>,
    %159 = arith.addf %140, %157 : vector<8x8xf32>
    %160 = arith.mulf %157, %157 : vector<8x8xf32>
    %161 = arith.addf %142, %160 : vector<8x8xf32>
    %cst_142 = arith.constant 0.000000e+00 : f32
    %162 = vector.broadcast %cst_142 : f32 to vector<8x8xf32>
    %c0_143 = arith.constant 0 : index
    %c0_144 = arith.constant 0 : index
    %163 = vector.load %arg4[%c0_143, %c0_144] : memref<8x8xf32, #tpu.memory_space<vmem>>, vector<8x8xf32>
    tpu.vector_store %arg4[%c0_143, %c0_144], %162 {strides = array<i32>} : memref<8x8xf32, #tpu.memory_space<vmem>>, vector<8x8xf32>,
    %cst_145 = arith.constant dense<0.000000e+00> : vector<8xf32>
    %164 = vector.multi_reduction <add>, %159, %cst_145 [0] : vector<8x8xf32> to vector<8xf32>
    %165 = vector.shape_cast %164 : vector<8xf32> to vector<1x8xf32>
    %c0_146 = arith.constant 0 : index
    %c0_147 = arith.constant 0 : index
    %166 = vector.load %arg4[%c0_146, %c0_147] : memref<8x8xf32, #tpu.memory_space<vmem>>, vector<1x8xf32>
    tpu.vector_store %arg4[%c0_146, %c0_147], %165 {strides = array<i32>} : memref<8x8xf32, #tpu.memory_space<vmem>>, vector<1x8xf32>,
    %cst_148 = arith.constant dense<0.000000e+00> : vector<8xf32>
    %167 = vector.multi_reduction <add>, %161, %cst_148 [0] : vector<8x8xf32> to vector<8xf32>
    %168 = vector.shape_cast %167 : vector<8xf32> to vector<1x8xf32>
    %c1_149 = arith.constant 1 : index
    %c0_150 = arith.constant 0 : index
    %169 = vector.load %arg4[%c1_149, %c0_150] : memref<8x8xf32, #tpu.memory_space<vmem>>, vector<1x8xf32>
    tpu.vector_store %arg4[%c1_149, %c0_150], %168 {strides = array<i32>} : memref<8x8xf32, #tpu.memory_space<vmem>>, vector<1x8xf32>,
    return
  }
  func.func @transform_0(%arg0: i32) -> (i32, i32, i32) {
    %c0_i32 = arith.constant 0 : i32
    %c0_i32_0 = arith.constant 0 : i32
    %c0_i32_1 = arith.constant 0 : i32
    return %arg0, %c0_i32, %c0_i32_0 : i32, i32, i32
  }
  func.func @transform_1(%arg0: i32) -> (i32, i32, i32) {
    %c0_i32 = arith.constant 0 : i32
    %c0_i32_0 = arith.constant 0 : i32
    %c0_i32_1 = arith.constant 0 : i32
    %c0_i32_2 = arith.constant 0 : i32
    return %c0_i32, %c0_i32_0, %c0_i32_1 : i32, i32, i32
  }
  func.func @transform_2(%arg0: i32) -> (i32, i32) {
    %c0_i32 = arith.constant 0 : i32
    %c0_i32_0 = arith.constant 0 : i32
    return %arg0, %c0_i32 : i32, i32
  }
  func.func @transform_3(%arg0: i32) -> (i32, i32) {
    %c0_i32 = arith.constant 0 : i32
    %c0_i32_0 = arith.constant 0 : i32
    return %arg0, %c0_i32 : i32, i32
  }
}

module attributes {stable_mosaic.version = 11 : i64} {
  func.func @_bn_relu_kernel(%arg0: i32, %arg1: memref<16x64xf32, #tpu.memory_space<vmem>>, %arg2: memref<1x64xf32, #tpu.memory_space<vmem>>, %arg3: memref<1x64xf32, #tpu.memory_space<vmem>>, %arg4: memref<16x64xf32, #tpu.memory_space<vmem>>) attributes {dimension_semantics = [#tpu.dimension_semantics<parallel>], iteration_bounds = array<i64: 1>, scalar_prefetch = 0 : i64, scratch_operands = 0 : i64, tpu.core_type = #tpu.core_type<tc>, window_params = [{transform_indices = @transform_0, window_bounds = array<i64: 16, 64>}, {pipeline_mode = #tpu.pipeline_mode<synchronous>, transform_indices = @transform_1, window_bounds = array<i64: 1, 64>}, {pipeline_mode = #tpu.pipeline_mode<synchronous>, transform_indices = @transform_2, window_bounds = array<i64: 1, 64>}, {transform_indices = @transform_3, window_bounds = array<i64: 16, 64>}]} {
    %c0 = arith.constant 0 : index
    %c0_0 = arith.constant 0 : index
    %0 = vector.load %arg1[%c0, %c0_0] : memref<16x64xf32, #tpu.memory_space<vmem>>, vector<16x64xf32>
    %c0_1 = arith.constant 0 : index
    %c0_2 = arith.constant 0 : index
    %1 = vector.load %arg2[%c0_1, %c0_2] : memref<1x64xf32, #tpu.memory_space<vmem>>, vector<1x64xf32>
    %2 = vector.broadcast %1 : vector<1x64xf32> to vector<16x64xf32>
    %3 = arith.mulf %0, %2 : vector<16x64xf32>
    %c0_3 = arith.constant 0 : index
    %c0_4 = arith.constant 0 : index
    %4 = vector.load %arg3[%c0_3, %c0_4] : memref<1x64xf32, #tpu.memory_space<vmem>>, vector<1x64xf32>
    %5 = vector.broadcast %4 : vector<1x64xf32> to vector<16x64xf32>
    %6 = arith.addf %3, %5 : vector<16x64xf32>
    %cst = arith.constant 0.000000e+00 : f32
    %7 = vector.broadcast %cst : f32 to vector<16x64xf32>
    %8 = arith.maximumf %6, %7 : vector<16x64xf32>
    %c0_5 = arith.constant 0 : index
    %c0_6 = arith.constant 0 : index
    %9 = vector.load %arg4[%c0_5, %c0_6] : memref<16x64xf32, #tpu.memory_space<vmem>>, vector<16x64xf32>
    tpu.vector_store %arg4[%c0_5, %c0_6], %8 {strides = array<i32>} : memref<16x64xf32, #tpu.memory_space<vmem>>, vector<16x64xf32>,
    return
  }
  func.func @transform_0(%arg0: i32) -> (i32, i32) {
    %c0_i32 = arith.constant 0 : i32
    %c0_i32_0 = arith.constant 0 : i32
    return %arg0, %c0_i32 : i32, i32
  }
  func.func @transform_1(%arg0: i32) -> (i32, i32) {
    %c0_i32 = arith.constant 0 : i32
    %c0_i32_0 = arith.constant 0 : i32
    %c0_i32_1 = arith.constant 0 : i32
    return %c0_i32, %c0_i32_0 : i32, i32
  }
  func.func @transform_2(%arg0: i32) -> (i32, i32) {
    %c0_i32 = arith.constant 0 : i32
    %c0_i32_0 = arith.constant 0 : i32
    %c0_i32_1 = arith.constant 0 : i32
    return %c0_i32, %c0_i32_0 : i32, i32
  }
  func.func @transform_3(%arg0: i32) -> (i32, i32) {
    %c0_i32 = arith.constant 0 : i32
    %c0_i32_0 = arith.constant 0 : i32
    return %arg0, %c0_i32 : i32, i32
  }
}

</mosaic_0001>

<llo_original>
// kernel: tile.13
$region0: #{tile.13}
  #allocation0 [shape = 's32[1]{0}', space=sflag, size = 0x4, scoped, tag = 'scoped memory for tile.13']
  %s0 = inlined_call_operand.vmem [shape: f32[8], index: 0, kind: input, shape index: {}]
  %s1 = inlined_call_operand.vmem [shape: f32[8,8], index: 1, kind: output, shape index: {}]
  // Predicated region
  $region2: #{tile.13} parent=0 // pred_check
    _
  $region3: #{tile.13} parent=0 // pred_check_branch
    %3 = sbr.rel (0) target = $region5
  $region4: #{tile.13} parent=0 // pred_region
    _
  $region5: #{tile.13} parent=0 // pred_fallthru
    _
  %v4 = vld [vmem:[%s0] ss:$0 sm:$0xff]
  %5 = vst [vmem:[%s1] sm:$0xff] %v4

// kernel: tile.14
$region0: #{tile.14}
  %s0 = inlined_call_operand.vmem [shape: f32[8,8], index: 0, kind: input, shape index: {}]
  %s1 = inlined_call_operand.vmem [shape: f32[1,64], index: 1, kind: output, shape index: {}]
  $region1: #{tile.14} parent=0
    #allocation0 [shape = 'u8[4096]{0}', space=vmem, size = 0x1000, scoped, tag = 'scoped mem for output reshape']
    %v2 = vld [vmem:[%s0] sm:$0x1]
    %vm3 = vcmask 64512
    %4 = vst.msk [vmem:[#allocation0] sm:$0x1] %vm3, %v2
    %s5 = scalar_lea.vmem %s0, 7
    %v6 = vld [vmem:[%s5] sm:$0x1]
    %7 = vrot.lane.b32.xlu0 %v6, 56
    %v8 = vpop.permute.xlu0 %7
    %vm9 = vcmask 523712
    %10 = vst.msk [vmem:[#allocation0] sm:$0x1] %vm9, %v8
    %s11 = scalar_lea.vmem %s0, 6
    %v12 = vld [vmem:[%s11] sm:$0x1]
    %13 = vrot.lane.b32.xlu0 %v12, 48
    %v14 = vpop.permute.xlu0 %13
    %vm15 = vcmask 458112
    %16 = vst.msk [vmem:[#allocation0] sm:$0x1] %vm15, %v14
    %s17 = scalar_lea.vmem %s0, 5
    %v18 = vld [vmem:[%s17] sm:$0x1]
    %19 = vrot.lane.b32.xlu0 %v18, 40
    %v20 = vpop.permute.xlu0 %19
    %vm21 = vcmask 392512
    %22 = vst.msk [vmem:[#allocation0] sm:$0x1] %vm21, %v20
    %s23 = scalar_lea.vmem %s0, 4
    %v24 = vld [vmem:[%s23] sm:$0x1]
    %25 = vrot.lane.b32.xlu0 %v24, 32
    %v26 = vpop.permute.xlu0 %25
    %vm27 = vcmask 326912
    %28 = vst.msk [vmem:[#allocation0] sm:$0x1] %vm27, %v26
    %s29 = scalar_lea.vmem %s0, 3
    %v30 = vld [vmem:[%s29] sm:$0x1]
    %31 = vrot.lane.b32.xlu0 %v30, 24
    %v32 = vpop.permute.xlu0 %31
    %vm33 = vcmask 261312
    %34 = vst.msk [vmem:[#allocation0] sm:$0x1] %vm33, %v32
    %s35 = scalar_lea.vmem %s0, 2
    %v36 = vld [vmem:[%s35] sm:$0x1]
    %37 = vrot.lane.b32.xlu0 %v36, 16
    %v38 = vpop.permute.xlu0 %37
    %vm39 = vcmask 195712
    %40 = vst.msk [vmem:[#allocation0] sm:$0x1] %vm39, %v38
    %s41 = scalar_lea.vmem %s0, 1
    %v42 = vld [vmem:[%s41] sm:$0x1]
    %43 = vrot.lane.b32.xlu0 %v42, 8
    %v44 = vpop.permute.xlu0 %43
    %vm45 = vcmask 130112
    %46 = vst.msk [vmem:[#allocation0] sm:$0x1] %vm45, %v44
    %s48 = sshllo.u32 0, 1
    %v50 = vld [vmem:[#allocation0] sm:%s48]
    %s51 = sshllo.u32 0, 1
    %52 = vst [vmem:[%s1] sm:%s51] %v50

// kernel: down_conv_forward.3
$region0: #{down_conv_forward.3}
  #allocation0 [shape = 'u32[]', space=smem, size = 0x4, offset = 0x4, fixed_abs, tag = 'smem constant byte address 0x4 - core index']
  #allocation1 [shape = 'u32[144,128]{1,0:T(1,128)}', space=vmem, size = 0x12000, scoped, tag = 'internal scratch']
  %s0 = inlined_call_operand.vmem [shape: f32[16,64], index: 0, kind: input, shape index: {}]
  %s1 = inlined_call_operand.vmem [shape: f32[1,64], index: 1, kind: input, shape index: {}]
  %s2 = inlined_call_operand.vmem [shape: f32[1,64], index: 2, kind: input, shape index: {}]
  %s3 = inlined_call_operand.vmem [shape: f32[16,64], index: 3, kind: output, shape index: {}]
  %s4 = sld [smem:[#allocation0]]
  $region22: #{down_conv_forward.3} parent=0
    _
  %s6 = ssub.s32 1, %s4
  %s7 = scalar_select 0, %s6, %s4
  // Predicated region
  $region2: #{down_conv_forward.3} parent=0 // pred_check
    _
  $region3: #{down_conv_forward.3} parent=0 // pred_check_branch
    %9 = sbr.rel (0) target = $region5
  $region4: #{down_conv_forward.3} parent=0 // pred_region
    _
  $region5: #{down_conv_forward.3} parent=0 // pred_fallthru
    _
  // Predicated region
  $region6: #{down_conv_forward.3} parent=0 // pred_check
    _
  $region7: #{down_conv_forward.3} parent=0 // pred_check_branch
    %11 = sbr.rel (0) target = $region9
  $region8: #{down_conv_forward.3} parent=0 // pred_region
    _
  $region9: #{down_conv_forward.3} parent=0 // pred_fallthru
    _
  // Predicated region
  $region10: #{down_conv_forward.3} parent=0 // pred_check
    _
  $region11: #{down_conv_forward.3} parent=0 // pred_check_branch
    %13 = sbr.rel (0) target = $region13
  $region12: #{down_conv_forward.3} parent=0 // pred_region
    _
  $region13: #{down_conv_forward.3} parent=0 // pred_fallthru
    _
  %v14 = vld [vmem:[%s0] sm:$0xff]
  %v15 = vld [vmem:[%s0 + $0x8] sm:$0xff]
  %v16 = vld [vmem:[%s1] sm:$0x1]
  %v18 = vlaneseq
  %v19 = vshrl.u32 %v18, 7
  %v20 = vsub.s32 0, %v19
  %v21 = vrot.slane %v16, %v20
  %v23 = vmul.f32 %v14, %v21
  %v24 = vmul.f32 %v15, %v21
  %v25 = vld [vmem:[%s2] sm:$0x1]
  %v27 = vlaneseq
  %v28 = vshrl.u32 %v27, 7
  %v29 = vsub.s32 0, %v28
  %v30 = vrot.slane %v25, %v29
  %v32 = vadd.f32 %v23, %v30
  %v33 = vadd.f32 %v24, %v30
  %v34 = vmax.f32 %v32, 0.0
  %v35 = vmax.f32 %v33, 0.0
  %vm36 = vcmask 523264
  %37 = vst.msk [vmem:[%s3] sm:$0xff] %vm36, %v34
  %38 = vst.msk [vmem:[%s3 + $0x8] sm:$0xff] %vm36, %v35
  // Predicated region
  $region14: #{down_conv_forward.3} parent=0 // pred_check
    _
  $region15: #{down_conv_forward.3} parent=0 // pred_check_branch
    %40 = sbr.rel (0) target = $region17
  $region16: #{down_conv_forward.3} parent=0 // pred_region
    _
  $region17: #{down_conv_forward.3} parent=0 // pred_fallthru
    _
  // Predicated region
  $region18: #{down_conv_forward.3} parent=0 // pred_check
    _
  $region19: #{down_conv_forward.3} parent=0 // pred_check_branch
    %42 = sbr.rel (0) target = $region21
  $region20: #{down_conv_forward.3} parent=0 // pred_region
    _
  $region21: #{down_conv_forward.3} parent=0 // pred_fallthru
    _

// kernel: down_conv_forward.2
$region0: #{down_conv_forward.2}
  #allocation0 [shape = 'u32[]', space=smem, size = 0x4, offset = 0x4, fixed_abs, tag = 'smem constant byte address 0x4 - core index']
  #allocation1 [shape = 'u32[144,128]{1,0:T(1,128)}', space=vmem, size = 0x12000, scoped, tag = 'internal scratch']
  %s0 = inlined_call_operand.vmem [shape: bf16[18,9,16], index: 0, kind: input, shape index: {}]
  %s1 = inlined_call_operand.vmem [shape: bf16[4,16,8], index: 1, kind: input, shape index: {}]
  %s2 = inlined_call_operand.vmem [shape: f32[128,8], index: 2, kind: output, shape index: {0}]
  %s3 = inlined_call_operand.vmem [shape: f32[16,8], index: 3, kind: output, shape index: {1}]
  %4 = xla_tuple %s2, %s3
  %s5 = sld [smem:[#allocation0]]
  $region49: #{down_conv_forward.2} parent=0
    _
  %s7 = ssub.s32 1, %s5
  %s8 = scalar_select 0, %s7, %s5
  loop: start=0, step=1, limit=4
  $region2: #{down_conv_forward.2} parent=0 // loop_pre_header
    _
  $region3: #{down_conv_forward.2} parent=0 // loop_header
    %s10 = sphi 0, %s14
    %p11 = scmp.ge.s32.totalorder %s10, 4
    %s20 = sphi 0, %s22
    %s23 = sphi 0, %s20
    %s24 = sphi 0, %s23
    %s40 = sphi 0, %s24
    %s44 = sphi 0, %s44
    %s46 = sphi 0, %s44
    %s47 = sphi 0, %s46
    %s61 = sphi 0, %s47
    %s67 = sphi 0, %s69
    %s70 = sphi 0, %s67
    %s71 = sphi 0, %s70
    %s87 = sphi 0, %s71
    %s93 = sphi 0, %s95
    %s96 = sphi 0, %s93
    %s97 = sphi 0, %s96
    %s113 = sphi 0, %s97
  $region4: #{down_conv_forward.2} parent=0 // loop_header_branch
    %13 = sbr.rel (%p11) target = $region8
  $region5: #{down_conv_forward.2} parent=0 // loop_body
    %s15 = ssub.s32 %s10, 1
    %s16 = ssub.s32 %s10, 2
    %s17 = sadd.s32 %s10, 1
    %s18 = ssub.s32 %s10, %s17
    %p19 = scmp.eq.s32.totalorder %s18, 0
    %s21 = sadd.s32 %s20, 1
    %s22 = scalar_select %p19, %s20, %s21
    %p25 = pneg %p19
    %p26 = scmp.eq.s32.totalorder %s10, 1
    %p27 = por %p25, %p26
    %p28 = scmp.ne.s32.totalorder %s20, %s23
    %p29 = scmp.eq.s32.totalorder %s10, 0
    %p30 = por %p28, %p29
    %p31 = scmp.ne.s32.totalorder %s20, %s23
    %p32 = scmp.eq.s32.totalorder %s15, 1
    %p33 = por %p31, %p32
    %p34 = scmp.ne.s32.totalorder %s23, %s24
    %p35 = scmp.eq.s32.totalorder %s15, 0
    %p36 = por %p34, %p35
    %p37 = scmp.ne.s32.totalorder %s23, %s24
    %p38 = scmp.eq.s32.totalorder %s16, 1
    %p39 = por %p37, %p38
    %p41 = scmp.ne.s32.totalorder %s24, %s40
    %p42 = scmp.eq.s32.totalorder %s16, 0
    %p43 = por %p41, %p42
    %s45 = sadd.s32 %s44, 1
    %p48 = scmp.eq.s32.totalorder %s10, 1
    %p49 = scmp.ne.s32.totalorder %s44, %s46
    %p50 = scmp.eq.s32.totalorder %s10, 0
    %p51 = por %p49, %p50
    %p52 = scmp.ne.s32.totalorder %s44, %s46
    %p53 = scmp.eq.s32.totalorder %s15, 1
    %p54 = por %p52, %p53
    %p55 = scmp.ne.s32.totalorder %s46, %s47
    %p56 = scmp.eq.s32.totalorder %s15, 0
    %p57 = por %p55, %p56
    %p58 = scmp.ne.s32.totalorder %s46, %s47
    %p59 = scmp.eq.s32.totalorder %s16, 1
    %p60 = por %p58, %p59
    %p62 = scmp.ne.s32.totalorder %s47, %s61
    %p63 = scmp.eq.s32.totalorder %s16, 0
    %p64 = por %p62, %p63
    %s65 = ssub.s32 %s10, %s17
    %p66 = scmp.eq.s32.totalorder %s65, 0
    %s68 = sadd.s32 %s67, 1
    %s69 = scalar_select %p66, %s67, %s68
    %p72 = pneg %p66
    %p73 = scmp.eq.s32.totalorder %s10, 1
    %p74 = por %p72, %p73
    %p75 = scmp.ne.s32.totalorder %s67, %s70
    %p76 = scmp.eq.s32.totalorder %s10, 0
    %p77 = por %p75, %p76
    %p78 = scmp.ne.s32.totalorder %s67, %s70
    %p79 = scmp.eq.s32.totalorder %s15, 1
    %p80 = por %p78, %p79
    %p81 = scmp.ne.s32.totalorder %s70, %s71
    %p82 = scmp.eq.s32.totalorder %s15, 0
    %p83 = por %p81, %p82
    %p84 = scmp.ne.s32.totalorder %s70, %s71
    %p85 = scmp.eq.s32.totalorder %s16, 1
    %p86 = por %p84, %p85
    %p88 = scmp.ne.s32.totalorder %s71, %s87
    %p89 = scmp.eq.s32.totalorder %s16, 0
    %p90 = por %p88, %p89
    %s91 = ssub.s32 %s10, %s17
    %p92 = scmp.eq.s32.totalorder %s91, 0
    %s94 = sadd.s32 %s93, 1
    %s95 = scalar_select %p92, %s93, %s94
    %p98 = pneg %p92
    %p99 = scmp.eq.s32.totalorder %s10, 1
    %p100 = por %p98, %p99
    %p101 = scmp.ne.s32.totalorder %s93, %s96
    %p102 = scmp.eq.s32.totalorder %s10, 0
    %p103 = por %p101, %p102
    %p104 = scmp.ne.s32.totalorder %s93, %s96
    %p105 = scmp.eq.s32.totalorder %s15, 1
    %p106 = por %p104, %p105
    %p107 = scmp.ne.s32.totalorder %s96, %s97
    %p108 = scmp.eq.s32.totalorder %s15, 0
    %p109 = por %p107, %p108
    %p110 = scmp.ne.s32.totalorder %s96, %s97
    %p111 = scmp.eq.s32.totalorder %s16, 1
    %p112 = por %p110, %p111
    %p114 = scmp.ne.s32.totalorder %s97, %s113
    %p115 = scmp.eq.s32.totalorder %s16, 0
    %p116 = por %p114, %p115
    %p117 = scmp.le.s32.totalorder 1, %s10
    %p118 = scmp.lt.s32.totalorder %s10, 3
    %p119 = pnand %p117, %p118
    %p120 = pneg %p119
    // Predicated region
    $region9: #{down_conv_forward.2} parent=5 // pred_check
      _
    $region10: #{down_conv_forward.2} parent=5 // pred_check_branch
      %122 = sbr.rel (%p119) target = $region12
    $region11: #{down_conv_forward.2} parent=5 // pred_region
      %s123 = ssub.s32 %s10, 1
      // Predicated region
      $region13: #{down_conv_forward.2} parent=11 // pred_check
        %p124 = pneg %p57
      $region14: #{down_conv_forward.2} parent=11 // pred_check_branch
        %126 = sbr.rel (%p124) target = $region16
      $region15: #{down_conv_forward.2} parent=11 // pred_region
        _
      $region16: #{down_conv_forward.2} parent=11 // pred_fallthru
        _
    $region12: #{down_conv_forward.2} parent=5 // pred_fallthru
      _
    %p127 = scmp.lt.s32.totalorder %s10, 2
    // Predicated region
    $region17: #{down_conv_forward.2} parent=5 // pred_check
      %p128 = pneg %p127
    $region18: #{down_conv_forward.2} parent=5 // pred_check_branch
      %130 = sbr.rel (%p128) target = $region20
    $region19: #{down_conv_forward.2} parent=5 // pred_region
      // Predicated region
      $region21: #{down_conv_forward.2} parent=19 // pred_check
        %p131 = pneg %p30
      $region22: #{down_conv_forward.2} parent=19 // pred_check_branch
        %133 = sbr.rel (%p131) target = $region24
      $region23: #{down_conv_forward.2} parent=19 // pred_region
        %s134 = smul.u32 9, %s10
        %p135 = scmp.lt.s32.totalorder %s134, 17
        %s136 = scalar_select %p135, %s134, 17
        %s137 = smul.addr %s136, 2
        %s138 = smul.addr %s137, 4
        %s139 = scalar_lea.vmem %s0, %s138
        %s140 = smul.u32 9, %s10
      $region24: #{down_conv_forward.2} parent=19 // pred_fallthru
        _
    $region20: #{down_conv_forward.2} parent=5 // pred_fallthru
      _
    %p141 = scmp.le.s32.totalorder 1, %s10
    %p142 = scmp.lt.s32.totalorder %s10, 3
    %p143 = pnand %p141, %p142
    %p144 = pneg %p143
    // Predicated region
    $region25: #{down_conv_forward.2} parent=5 // pred_check
      _
    $region26: #{down_conv_forward.2} parent=5 // pred_check_branch
      %146 = sbr.rel (%p143) target = $region28
    $region27: #{down_conv_forward.2} parent=5 // pred_region
      %s147 = ssub.s32 %s10, 1
      %s148 = smul.u32 9, %s15
      %p149 = scmp.lt.s32.totalorder %s148, 17
      %s150 = scalar_select %p149, %s148, 17
      %s151 = smul.addr %s150, 2
      %s152 = smul.addr %s151, 4
      %s153 = scalar_lea.vmem %s0, %s152
      %p154 = pneg %p36
      %p155 = pneg %p33
      %p156 = pneg %p57
      %p157 = pneg %p54
      %p158 = pneg %p83
      %p159 = pneg %p80
      %s160 = smul.u32 8, %s15
      %p161 = scmp.lt.s32.totalorder %s160, 15
      %s162 = scalar_select %p161, %s160, 15
      %s163 = smul.addr %s162, 8
      %s164 = scalar_lea.vmem %s2, %s163
      %p165 = pneg %p109
      %p166 = pneg %p106
      %p167 = scmp.lt.s32.totalorder %s15, 1
      %s168 = scalar_select %p167, %s15, 1
      %s169 = smul.addr %s168, 8
      %s170 = scalar_lea.vmem %s3, %s169
      %s171 = smul.u32 9, %s15
      %p172 = scmp.lt.s32.totalorder %s171, 17
      %s173 = scalar_select %p172, %s171, 17
      %s174 = smul.addr %s173, 2
      %s175 = smul.addr %s174, 4
      %s176 = scalar_lea.vmem %s0, %s175
      %s177 = smul.u32 9, %s15
      %s178 = smul.u32 8, %s15
      %p179 = scmp.lt.s32.totalorder %s178, 15
      %s180 = scalar_select %p179, %s178, 15
      %s181 = smul.addr %s180, 8
      %s182 = scalar_lea.vmem %s2, %s181
      %s183 = smul.u32 8, %s15
      %p184 = scmp.lt.s32.totalorder %s15, 1
      %s185 = scalar_select %p184, %s15, 1
      %s186 = smul.addr %s185, 8
      %s187 = scalar_lea.vmem %s3, %s186
      %v189 = vld [vmem:[%s1] sm:$0xf]
      %v190 = vld [vmem:[%s1 + $0x4] sm:$0xf]
      %s191 = scalar_lea.vmem %s1, 8
      %v192 = vld [vmem:[%s191] sm:$0xf]
      %v193 = vld [vmem:[%s191 + $0x4] sm:$0xf]
      %s194 = scalar_lea.vmem %s1, 16
      %v195 = vld [vmem:[%s194] sm:$0xf]
      %v196 = vld [vmem:[%s194 + $0x4] sm:$0xf]
      %s197 = scalar_lea.vmem %s1, 24
      %v198 = vld [vmem:[%s197] sm:$0xf]
      %v199 = vld [vmem:[%s197 + $0x4] sm:$0xf]
      %v200 = vld [vmem:[%s176] sm:$0xf]
      %v201 = vld [vmem:[%s176 + $0x4] sm:$0x1]
      %v204 = vunpack.c.l.b16 %v200
      %v205 = vunpack.c.l.b16 %v201
      %v206 = vpack.c.b16 %v205, %v204
      %v208 = vshrl.u32 %v206, 16
      %v210 = vshll.u32 %v206, 16
      %v212 = vrot.slane %v210, 1
      %v213 = vor.u32 %v208, %v212
      %v216 = vunpack.c.l.b16 %v192
      %v217 = vunpack.c.l.b16 %v193
      %v218 = vpack.c.b16 %v217, %v216
      %vm220 = vcmask 130048
      %v222 = vsel %vm220, %v213, 0
      %224 = vmatprep.subr.bf16.mxu0 0
      %225 = vmatpush1.bf16.msra.mxu0 %v218
      %226 = vmatprep.subr.bf16.mxu0 0
      %227 = vmatpush1.bf16.msra.mxu0 0
      %228 = vmatprep.subr.bf16.mxu0 0
      %229 = vmatpush1.bf16.msra.mxu0 0
      %230 = vmatprep.subr.bf16.mxu0 0
      %231 = vmatpush1.bf16.msra.mxu0 0
      %232 = vmatprep.subr.bf16.mxu0 0
      %233 = vmatpush1.bf16.msra.mxu0 0
      %234 = vmatprep.subr.bf16.mxu0 0
      %235 = vmatpush1.bf16.msra.mxu0 0
      %236 = vmatprep.subr.bf16.mxu0 0
      %237 = vmatpush1.bf16.msra.mxu0 0
      %238 = vmatprep.subr.bf16.mxu0 0
      %239 = vmatpush1.bf16.msra.mxu0 0
      %240 = vmatprep.subr.bf16.mxu0 0
      %241 = vmatpush1.bf16.msra.mxu0 0
      %242 = vmatprep.subr.bf16.mxu0 0
      %243 = vmatpush1.bf16.msra.mxu0 0
      %244 = vmatprep.subr.bf16.mxu0 0
      %245 = vmatpush1.bf16.msra.mxu0 0
      %246 = vmatprep.subr.bf16.mxu0 0
      %247 = vmatpush1.bf16.msra.mxu0 0
      %248 = vmatprep.subr.bf16.mxu0 0
      %249 = vmatpush1.bf16.msra.mxu0 0
      %250 = vmatprep.subr.bf16.mxu0 0
      %251 = vmatpush1.bf16.msra.mxu0 0
      %252 = vmatprep.subr.bf16.mxu0 0
      %253 = vmatpush1.bf16.msra.mxu0 0
      %254 = vmatprep.subr.bf16.mxu0 0
      %255 = vmatpush1.bf16.msra.mxu0 0
      %256 = vmatprep.mubr.bf16.mxu0 0
      %257 = vmatmul.mubr.bf16.gmra.mrb[0].mxu0 %v222
      %v258 = vpop.f32.mrb[0].mxu0
      %v259 = vadd.f32 0.0, %v258
      %v260 = vpop.f32.mrb[0].mxu0
      %v261 = vpop.f32.mrb[0].mxu0
      %v262 = vpop.f32.mrb[0].mxu0
      %263 = vdwg.mxu0
      %v266 = vunpack.c.l.b16 %v189
      %v267 = vunpack.c.l.b16 %v190
      %v268 = vpack.c.b16 %v267, %v266
      %v271 = vsel %vm220, %v200, 0
      %273 = vmatprep.subr.bf16.mxu0 0
      %274 = vmatpush1.bf16.msra.mxu0 %v268
      %275 = vmatprep.subr.bf16.mxu0 0
      %276 = vmatpush1.bf16.msra.mxu0 0
      %277 = vmatprep.subr.bf16.mxu0 0
      %278 = vmatpush1.bf16.msra.mxu0 0
      %279 = vmatprep.subr.bf16.mxu0 0
      %280 = vmatpush1.bf16.msra.mxu0 0
      %281 = vmatprep.subr.bf16.mxu0 0
      %282 = vmatpush1.bf16.msra.mxu0 0
      %283 = vmatprep.subr.bf16.mxu0 0
      %284 = vmatpush1.bf16.msra.mxu0 0
      %285 = vmatprep.subr.bf16.mxu0 0
      %286 = vmatpush1.bf16.msra.mxu0 0
      %287 = vmatprep.subr.bf16.mxu0 0
      %288 = vmatpush1.bf16.msra.mxu0 0
      %289 = vmatprep.subr.bf16.mxu0 0
      %290 = vmatpush1.bf16.msra.mxu0 0
      %291 = vmatprep.subr.bf16.mxu0 0
      %292 = vmatpush1.bf16.msra.mxu0 0
      %293 = vmatprep.subr.bf16.mxu0 0
      %294 = vmatpush1.bf16.msra.mxu0 0
      %295 = vmatprep.subr.bf16.mxu0 0
      %296 = vmatpush1.bf16.msra.mxu0 0
      %297 = vmatprep.subr.bf16.mxu0 0
      %298 = vmatpush1.bf16.msra.mxu0 0
      %299 = vmatprep.subr.bf16.mxu0 0
      %300 = vmatpush1.bf16.msra.mxu0 0
      %301 = vmatprep.subr.bf16.mxu0 0
      %302 = vmatpush1.bf16.msra.mxu0 0
      %303 = vmatprep.subr.bf16.mxu0 0
      %304 = vmatpush1.bf16.msra.mxu0 0
      %305 = vmatprep.mubr.bf16.mxu0 0
      %306 = vmatmul.mubr.bf16.gmra.mrb[0].mxu0 %v271
      %v307 = vpop.f32.mrb[0].mxu0
      %v308 = vadd.f32 %v259, %v307
      %v309 = vpop.f32.mrb[0].mxu0
      %v310 = vpop.f32.mrb[0].mxu0
      %v311 = vpop.f32.mrb[0].mxu0
      %312 = vdwg.mxu0
      %s313 = scalar_lea.vmem %s176, 8
      %v314 = vld [vmem:[%s313] sm:$0xf]
      %v317 = vunpack.c.l.b16 %v195
      %v318 = vunpack.c.l.b16 %v196
      %v319 = vpack.c.b16 %v318, %v317
      %v322 = vsel %vm220, %v314, 0
      %324 = vmatprep.subr.bf16.mxu0 0
      %325 = vmatpush1.bf16.msra.mxu0 %v319
      %326 = vmatprep.subr.bf16.mxu0 0
      %327 = vmatpush1.bf16.msra.mxu0 0
      %328 = vmatprep.subr.bf16.mxu0 0
      %329 = vmatpush1.bf16.msra.mxu0 0
      %330 = vmatprep.subr.bf16.mxu0 0
      %331 = vmatpush1.bf16.msra.mxu0 0
      %332 = vmatprep.subr.bf16.mxu0 0
      %333 = vmatpush1.bf16.msra.mxu0 0
      %334 = vmatprep.subr.bf16.mxu0 0
      %335 = vmatpush1.bf16.msra.mxu0 0
      %336 = vmatprep.subr.bf16.mxu0 0
      %337 = vmatpush1.bf16.msra.mxu0 0
      %338 = vmatprep.subr.bf16.mxu0 0
      %339 = vmatpush1.bf16.msra.mxu0 0
      %340 = vmatprep.subr.bf16.mxu0 0
      %341 = vmatpush1.bf16.msra.mxu0 0
      %342 = vmatprep.subr.bf16.mxu0 0
      %343 = vmatpush1.bf16.msra.mxu0 0
      %344 = vmatprep.subr.bf16.mxu0 0
      %345 = vmatpush1.bf16.msra.mxu0 0
      %346 = vmatprep.subr.bf16.mxu0 0
      %347 = vmatpush1.bf16.msra.mxu0 0
      %348 = vmatprep.subr.bf16.mxu0 0
      %349 = vmatpush1.bf16.msra.mxu0 0
      %350 = vmatprep.subr.bf16.mxu0 0
      %351 = vmatpush1.bf16.msra.mxu0 0
      %352 = vmatprep.subr.bf16.mxu0 0
      %353 = vmatpush1.bf16.msra.mxu0 0
      %354 = vmatprep.subr.bf16.mxu0 0
      %355 = vmatpush1.bf16.msra.mxu0 0
      %356 = vmatprep.mubr.bf16.mxu0 0
      %357 = vmatmul.mubr.bf16.gmra.mrb[0].mxu0 %v322
      %v358 = vpop.f32.mrb[0].mxu0
      %v359 = vadd.f32 0.0, %v358
      %v360 = vpop.f32.mrb[0].mxu0
      %v361 = vpop.f32.mrb[0].mxu0
      %v362 = vpop.f32.mrb[0].mxu0
      %363 = vdwg.mxu0
      %v364 = vadd.f32 %v308, %v359
      %v365 = vld [vmem:[%s313] sm:$0xf]
      %v366 = vld [vmem:[%s313 + $0x4] sm:$0x1]
      %v369 = vunpack.c.l.b16 %v365
      %v370 = vunpack.c.l.b16 %v366
      %v371 = vpack.c.b16 %v370, %v369
      %v373 = vshrl.u32 %v371, 16
      %v375 = vshll.u32 %v371, 16
      %v377 = vrot.slane %v375, 1
      %v378 = vor.u32 %v373, %v377
      %v381 = vunpack.c.l.b16 %v198
      %v382 = vunpack.c.l.b16 %v199
      %v383 = vpack.c.b16 %v382, %v381
      %v386 = vsel %vm220, %v378, 0
      %388 = vmatprep.subr.bf16.mxu0 0
      %389 = vmatpush1.bf16.msra.mxu0 %v383
      %390 = vmatprep.subr.bf16.mxu0 0
      %391 = vmatpush1.bf16.msra.mxu0 0
      %392 = vmatprep.subr.bf16.mxu0 0
      %393 = vmatpush1.bf16.msra.mxu0 0
      %394 = vmatprep.subr.bf16.mxu0 0
      %395 = vmatpush1.bf16.msra.mxu0 0
      %396 = vmatprep.subr.bf16.mxu0 0
      %397 = vmatpush1.bf16.msra.mxu0 0
      %398 = vmatprep.subr.bf16.mxu0 0
      %399 = vmatpush1.bf16.msra.mxu0 0
      %400 = vmatprep.subr.bf16.mxu0 0
      %401 = vmatpush1.bf16.msra.mxu0 0
      %402 = vmatprep.subr.bf16.mxu0 0
      %403 = vmatpush1.bf16.msra.mxu0 0
      %404 = vmatprep.subr.bf16.mxu0 0
      %405 = vmatpush1.bf16.msra.mxu0 0
      %406 = vmatprep.subr.bf16.mxu0 0
      %407 = vmatpush1.bf16.msra.mxu0 0
      %408 = vmatprep.subr.bf16.mxu0 0
      %409 = vmatpush1.bf16.msra.mxu0 0
      %410 = vmatprep.subr.bf16.mxu0 0
      %411 = vmatpush1.bf16.msra.mxu0 0
      %412 = vmatprep.subr.bf16.mxu0 0
      %413 = vmatpush1.bf16.msra.mxu0 0
      %414 = vmatprep.subr.bf16.mxu0 0
      %415 = vmatpush1.bf16.msra.mxu0 0
      %416 = vmatprep.subr.bf16.mxu0 0
      %417 = vmatpush1.bf16.msra.mxu0 0
      %418 = vmatprep.subr.bf16.mxu0 0
      %419 = vmatpush1.bf16.msra.mxu0 0
      %420 = vmatprep.mubr.bf16.mxu0 0
      %421 = vmatmul.mubr.bf16.gmra.mrb[0].mxu0 %v386
      %v422 = vpop.f32.mrb[0].mxu0
      %v423 = vadd.f32 0.0, %v422
      %v424 = vpop.f32.mrb[0].mxu0
      %v425 = vpop.f32.mrb[0].mxu0
      %v426 = vpop.f32.mrb[0].mxu0
      %427 = vdwg.mxu0
      %v428 = vadd.f32 %v364, %v423
      %vm429 = vcmask 64512
      %430 = vst.msk [vmem:[%s182] sm:$0xff] %vm429, %v428
      %v431 = vadd.f32 %v428, 0.0
      %v432 = vmul.f32 %v428, %v428
      %v433 = vadd.f32 %v432, 0.0
      %v434 = vld [vmem:[%s313] sm:$0xf]
      %v435 = vld [vmem:[%s313 + $0x4] sm:$0x1]
      %v438 = vunpack.c.l.b16 %v434
      %v439 = vunpack.c.l.b16 %v435
      %v440 = vpack.c.b16 %v439, %v438
      %v442 = vshrl.u32 %v440, 16
      %v444 = vshll.u32 %v440, 16
      %v446 = vrot.slane %v444, 1
      %v447 = vor.u32 %v442, %v446
      %v449 = vsel %vm220, %v447, 0
      %451 = vmatprep.subr.bf16.mxu0 0
      %452 = vmatpush1.bf16.msra.mxu0 %v218
      %453 = vmatprep.subr.bf16.mxu0 0
      %454 = vmatpush1.bf16.msra.mxu0 0
      %455 = vmatprep.subr.bf16.mxu0 0
      %456 = vmatpush1.bf16.msra.mxu0 0
      %457 = vmatprep.subr.bf16.mxu0 0
      %458 = vmatpush1.bf16.msra.mxu0 0
      %459 = vmatprep.subr.bf16.mxu0 0
      %460 = vmatpush1.bf16.msra.mxu0 0
      %461 = vmatprep.subr.bf16.mxu0 0
      %462 = vmatpush1.bf16.msra.mxu0 0
      %463 = vmatprep.subr.bf16.mxu0 0
      %464 = vmatpush1.bf16.msra.mxu0 0
      %465 = vmatprep.subr.bf16.mxu0 0
      %466 = vmatpush1.bf16.msra.mxu0 0
      %467 = vmatprep.subr.bf16.mxu0 0
      %468 = vmatpush1.bf16.msra.mxu0 0
      %469 = vmatprep.subr.bf16.mxu0 0
      %470 = vmatpush1.bf16.msra.mxu0 0
      %471 = vmatprep.subr.bf16.mxu0 0
      %472 = vmatpush1.bf16.msra.mxu0 0
      %473 = vmatprep.subr.bf16.mxu0 0
      %474 = vmatpush1.bf16.msra.mxu0 0
      %475 = vmatprep.subr.bf16.mxu0 0
      %476 = vmatpush1.bf16.msra.mxu0 0
      %477 = vmatprep.subr.bf16.mxu0 0
      %478 = vmatpush1.bf16.msra.mxu0 0
      %479 = vmatprep.subr.bf16.mxu0 0
      %480 = vmatpush1.bf16.msra.mxu0 0
      %481 = vmatprep.subr.bf16.mxu0 0
      %482 = vmatpush1.bf16.msra.mxu0 0
      %483 = vmatprep.mubr.bf16.mxu0 0
      %484 = vmatmul.mubr.bf16.gmra.mrb[0].mxu0 %v449
      %v485 = vpop.f32.mrb[0].mxu0
      %v486 = vadd.f32 0.0, %v485
      %v487 = vpop.f32.mrb[0].mxu0
      %v488 = vpop.f32.mrb[0].mxu0
      %v489 = vpop.f32.mrb[0].mxu0
      %490 = vdwg.mxu0
      %v492 = vsel %vm220, %v434, 0
      %494 = vmatprep.subr.bf16.mxu0 0
      %495 = vmatpush1.bf16.msra.mxu0 %v268
      %496 = vmatprep.subr.bf16.mxu0 0
      %497 = vmatpush1.bf16.msra.mxu0 0
      %498 = vmatprep.subr.bf16.mxu0 0
      %499 = vmatpush1.bf16.msra.mxu0 0
      %500 = vmatprep.subr.bf16.mxu0 0
      %501 = vmatpush1.bf16.msra.mxu0 0
      %502 = vmatprep.subr.bf16.mxu0 0
      %503 = vmatpush1.bf16.msra.mxu0 0
      %504 = vmatprep.subr.bf16.mxu0 0
      %505 = vmatpush1.bf16.msra.mxu0 0
      %506 = vmatprep.subr.bf16.mxu0 0
      %507 = vmatpush1.bf16.msra.mxu0 0
      %508 = vmatprep.subr.bf16.mxu0 0
      %509 = vmatpush1.bf16.msra.mxu0 0
      %510 = vmatprep.subr.bf16.mxu0 0
      %511 = vmatpush1.bf16.msra.mxu0 0
      %512 = vmatprep.subr.bf16.mxu0 0
      %513 = vmatpush1.bf16.msra.mxu0 0
      %514 = vmatprep.subr.bf16.mxu0 0
      %515 = vmatpush1.bf16.msra.mxu0 0
      %516 = vmatprep.subr.bf16.mxu0 0
      %517 = vmatpush1.bf16.msra.mxu0 0
      %518 = vmatprep.subr.bf16.mxu0 0
      %519 = vmatpush1.bf16.msra.mxu0 0
      %520 = vmatprep.subr.bf16.mxu0 0
      %521 = vmatpush1.bf16.msra.mxu0 0
      %522 = vmatprep.subr.bf16.mxu0 0
      %523 = vmatpush1.bf16.msra.mxu0 0
      %524 = vmatprep.subr.bf16.mxu0 0
      %525 = vmatpush1.bf16.msra.mxu0 0
      %526 = vmatprep.mubr.bf16.mxu0 0
      %527 = vmatmul.mubr.bf16.gmra.mrb[0].mxu0 %v492
      %v528 = vpop.f32.mrb[0].mxu0
      %v529 = vadd.f32 %v486, %v528
      %v530 = vpop.f32.mrb[0].mxu0
      %v531 = vpop.f32.mrb[0].mxu0
      %v532 = vpop.f32.mrb[0].mxu0
      %533 = vdwg.mxu0
      %s534 = scalar_lea.vmem %s176, 16
      %v535 = vld [vmem:[%s534] sm:$0xf]
      %v537 = vsel %vm220, %v535, 0
      %539 = vmatprep.subr.bf16.mxu0 0
      %540 = vmatpush1.bf16.msra.mxu0 %v319
      %541 = vmatprep.subr.bf16.mxu0 0
      %542 = vmatpush1.bf16.msra.mxu0 0
      %543 = vmatprep.subr.bf16.mxu0 0
      %544 = vmatpush1.bf16.msra.mxu0 0
      %545 = vmatprep.subr.bf16.mxu0 0
      %546 = vmatpush1.bf16.msra.mxu0 0
      %547 = vmatprep.subr.bf16.mxu0 0
      %548 = vmatpush1.bf16.msra.mxu0 0
      %549 = vmatprep.subr.bf16.mxu0 0
      %550 = vmatpush1.bf16.msra.mxu0 0
      %551 = vmatprep.subr.bf16.mxu0 0
      %552 = vmatpush1.bf16.msra.mxu0 0
      %553 = vmatprep.subr.bf16.mxu0 0
      %554 = vmatpush1.bf16.msra.mxu0 0
      %555 = vmatprep.subr.bf16.mxu0 0
      %556 = vmatpush1.bf16.msra.mxu0 0
      %557 = vmatprep.subr.bf16.mxu0 0
      %558 = vmatpush1.bf16.msra.mxu0 0
      %559 = vmatprep.subr.bf16.mxu0 0
      %560 = vmatpush1.bf16.msra.mxu0 0
      %561 = vmatprep.subr.bf16.mxu0 0
      %562 = vmatpush1.bf16.msra.mxu0 0
      %563 = vmatprep.subr.bf16.mxu0 0
      %564 = vmatpush1.bf16.msra.mxu0 0
      %565 = vmatprep.subr.bf16.mxu0 0
      %566 = vmatpush1.bf16.msra.mxu0 0
      %567 = vmatprep.subr.bf16.mxu0 0
      %568 = vmatpush1.bf16.msra.mxu0 0
      %569 = vmatprep.subr.bf16.mxu0 0
      %570 = vmatpush1.bf16.msra.mxu0 0
      %571 = vmatprep.mubr.bf16.mxu0 0
      %572 = vmatmul.mubr.bf16.gmra.mrb[0].mxu0 %v537
      %v573 = vpop.f32.mrb[0].mxu0
      %v574 = vadd.f32 0.0, %v573
      %v575 = vpop.f32.mrb[0].mxu0
      %v576 = vpop.f32.mrb[0].mxu0
      %v577 = vpop.f32.mrb[0].mxu0
      %578 = vdwg.mxu0
      %v579 = vadd.f32 %v529, %v574
      %v580 = vld [vmem:[%s534] sm:$0xf]
      %v581 = vld [vmem:[%s534 + $0x4] sm:$0x1]
      %v584 = vunpack.c.l.b16 %v580
      %v585 = vunpack.c.l.b16 %v581
      %v586 = vpack.c.b16 %v585, %v584
      %v588 = vshrl.u32 %v586, 16
      %v590 = vshll.u32 %v586, 16
      %v592 = vrot.slane %v590, 1
      %v593 = vor.u32 %v588, %v592
      %v595 = vsel %vm220, %v593, 0
      %597 = vmatprep.subr.bf16.mxu0 0
      %598 = vmatpush1.bf16.msra.mxu0 %v383
      %599 = vmatprep.subr.bf16.mxu0 0
      %600 = vmatpush1.bf16.msra.mxu0 0
      %601 = vmatprep.subr.bf16.mxu0 0
      %602 = vmatpush1.bf16.msra.mxu0 0
      %603 = vmatprep.subr.bf16.mxu0 0
      %604 = vmatpush1.bf16.msra.mxu0 0
      %605 = vmatprep.subr.bf16.mxu0 0
      %606 = vmatpush1.bf16.msra.mxu0 0
      %607 = vmatprep.subr.bf16.mxu0 0
      %608 = vmatpush1.bf16.msra.mxu0 0
      %609 = vmatprep.subr.bf16.mxu0 0
      %610 = vmatpush1.bf16.msra.mxu0 0
      %611 = vmatprep.subr.bf16.mxu0 0
      %612 = vmatpush1.bf16.msra.mxu0 0
      %613 = vmatprep.subr.bf16.mxu0 0
      %614 = vmatpush1.bf16.msra.mxu0 0
      %615 = vmatprep.subr.bf16.mxu0 0
      %616 = vmatpush1.bf16.msra.mxu0 0
      %617 = vmatprep.subr.bf16.mxu0 0
      %618 = vmatpush1.bf16.msra.mxu0 0
      %619 = vmatprep.subr.bf16.mxu0 0
      %620 = vmatpush1.bf16.msra.mxu0 0
      %621 = vmatprep.subr.bf16.mxu0 0
      %622 = vmatpush1.bf16.msra.mxu0 0
      %623 = vmatprep.subr.bf16.mxu0 0
      %624 = vmatpush1.bf16.msra.mxu0 0
      %625 = vmatprep.subr.bf16.mxu0 0
      %626 = vmatpush1.bf16.msra.mxu0 0
      %627 = vmatprep.subr.bf16.mxu0 0
      %628 = vmatpush1.bf16.msra.mxu0 0
      %629 = vmatprep.mubr.bf16.mxu0 0
      %630 = vmatmul.mubr.bf16.gmra.mrb[0].mxu0 %v595
      %v631 = vpop.f32.mrb[0].mxu0
      %v632 = vadd.f32 0.0, %v631
      %v633 = vpop.f32.mrb[0].mxu0
      %v634 = vpop.f32.mrb[0].mxu0
      %v635 = vpop.f32.mrb[0].mxu0
      %636 = vdwg.mxu0
      %v637 = vadd.f32 %v579, %v632
      %638 = vst.msk [vmem:[%s182 + $0x8] sm:$0xff] %vm429, %v637
      %v639 = vadd.f32 %v431, %v637
      %v640 = vmul.f32 %v637, %v637
      %v641 = vadd.f32 %v433, %v640
      %v642 = vld [vmem:[%s534] sm:$0xf]
      %v643 = vld [vmem:[%s534 + $0x4] sm:$0x1]
      %v646 = vunpack.c.l.b16 %v642
      %v647 = vunpack.c.l.b16 %v643
      %v648 = vpack.c.b16 %v647, %v646
      %v650 = vshrl.u32 %v648, 16
      %v652 = vshll.u32 %v648, 16
      %v654 = vrot.slane %v652, 1
      %v655 = vor.u32 %v650, %v654
      %v657 = vsel %vm220, %v655, 0
      %659 = vmatprep.subr.bf16.mxu0 0
      %660 = vmatpush1.bf16.msra.mxu0 %v218
      %661 = vmatprep.subr.bf16.mxu0 0
      %662 = vmatpush1.bf16.msra.mxu0 0
      %663 = vmatprep.subr.bf16.mxu0 0
      %664 = vmatpush1.bf16.msra.mxu0 0
      %665 = vmatprep.subr.bf16.mxu0 0
      %666 = vmatpush1.bf16.msra.mxu0 0
      %667 = vmatprep.subr.bf16.mxu0 0
      %668 = vmatpush1.bf16.msra.mxu0 0
      %669 = vmatprep.subr.bf16.mxu0 0
      %670 = vmatpush1.bf16.msra.mxu0 0
      %671 = vmatprep.subr.bf16.mxu0 0
      %672 = vmatpush1.bf16.msra.mxu0 0
      %673 = vmatprep.subr.bf16.mxu0 0
      %674 = vmatpush1.bf16.msra.mxu0 0
      %675 = vmatprep.subr.bf16.mxu0 0
      %676 = vmatpush1.bf16.msra.mxu0 0
      %677 = vmatprep.subr.bf16.mxu0 0
      %678 = vmatpush1.bf16.msra.mxu0 0
      %679 = vmatprep.subr.bf16.mxu0 0
      %680 = vmatpush1.bf16.msra.mxu0 0
      %681 = vmatprep.subr.bf16.mxu0 0
      %682 = vmatpush1.bf16.msra.mxu0 0
      %683 = vmatprep.subr.bf16.mxu0 0
      %684 = vmatpush1.bf16.msra.mxu0 0
      %685 = vmatprep.subr.bf16.mxu0 0
      %686 = vmatpush1.bf16.msra.mxu0 0
      %687 = vmatprep.subr.bf16.mxu0 0
      %688 = vmatpush1.bf16.msra.mxu0 0
      %689 = vmatprep.subr.bf16.mxu0 0
      %690 = vmatpush1.bf16.msra.mxu0 0
      %691 = vmatprep.mubr.bf16.mxu0 0
      %692 = vmatmul.mubr.bf16.gmra.mrb[0].mxu0 %v657
      %v693 = vpop.f32.mrb[0].mxu0
      %v694 = vadd.f32 0.0, %v693
      %v695 = vpop.f32.mrb[0].mxu0
      %v696 = vpop.f32.mrb[0].mxu0
      %v697 = vpop.f32.mrb[0].mxu0
      %698 = vdwg.mxu0
      %v700 = vsel %vm220, %v642, 0
      %702 = vmatprep.subr.bf16.mxu0 0
      %703 = vmatpush1.bf16.msra.mxu0 %v268
      %704 = vmatprep.subr.bf16.mxu0 0
      %705 = vmatpush1.bf16.msra.mxu0 0
      %706 = vmatprep.subr.bf16.mxu0 0
      %707 = vmatpush1.bf16.msra.mxu0 0
      %708 = vmatprep.subr.bf16.mxu0 0
      %709 = vmatpush1.bf16.msra.mxu0 0
      %710 = vmatprep.subr.bf16.mxu0 0
      %711 = vmatpush1.bf16.msra.mxu0 0
      %712 = vmatprep.subr.bf16.mxu0 0
      %713 = vmatpush1.bf16.msra.mxu0 0
      %714 = vmatprep.subr.bf16.mxu0 0
      %715 = vmatpush1.bf16.msra.mxu0 0
      %716 = vmatprep.subr.bf16.mxu0 0
      %717 = vmatpush1.bf16.msra.mxu0 0
      %718 = vmatprep.subr.bf16.mxu0 0
      %719 = vmatpush1.bf16.msra.mxu0 0
      %720 = vmatprep.subr.bf16.mxu0 0
      %721 = vmatpush1.bf16.msra.mxu0 0
      %722 = vmatprep.subr.bf16.mxu0 0
      %723 = vmatpush1.bf16.msra.mxu0 0
      %724 = vmatprep.subr.bf16.mxu0 0
      %725 = vmatpush1.bf16.msra.mxu0 0
      %726 = vmatprep.subr.bf16.mxu0 0
      %727 = vmatpush1.bf16.msra.mxu0 0
      %728 = vmatprep.subr.bf16.mxu0 0
      %729 = vmatpush1.bf16.msra.mxu0 0
      %730 = vmatprep.subr.bf16.mxu0 0
      %731 = vmatpush1.bf16.msra.mxu0 0
      %732 = vmatprep.subr.bf16.mxu0 0
      %733 = vmatpush1.bf16.msra.mxu0 0
      %734 = vmatprep.mubr.bf16.mxu0 0
      %735 = vmatmul.mubr.bf16.gmra.mrb[0].mxu0 %v700
      %v736 = vpop.f32.mrb[0].mxu0
      %v737 = vadd.f32 %v694, %v736
      %v738 = vpop.f32.mrb[0].mxu0
      %v739 = vpop.f32.mrb[0].mxu0
      %v740 = vpop.f32.mrb[0].mxu0
      %741 = vdwg.mxu0
      %s742 = scalar_lea.vmem %s176, 24
      %v743 = vld [vmem:[%s742] sm:$0xf]
      %v745 = vsel %vm220, %v743, 0
      %747 = vmatprep.subr.bf16.mxu0 0
      %748 = vmatpush1.bf16.msra.mxu0 %v319
      %749 = vmatprep.subr.bf16.mxu0 0
      %750 = vmatpush1.bf16.msra.mxu0 0
      %751 = vmatprep.subr.bf16.mxu0 0
      %752 = vmatpush1.bf16.msra.mxu0 0
      %753 = vmatprep.subr.bf16.mxu0 0
      %754 = vmatpush1.bf16.msra.mxu0 0
      %755 = vmatprep.subr.bf16.mxu0 0
      %756 = vmatpush1.bf16.msra.mxu0 0
      %757 = vmatprep.subr.bf16.mxu0 0
      %758 = vmatpush1.bf16.msra.mxu0 0
      %759 = vmatprep.subr.bf16.mxu0 0
      %760 = vmatpush1.bf16.msra.mxu0 0
      %761 = vmatprep.subr.bf16.mxu0 0
      %762 = vmatpush1.bf16.msra.mxu0 0
      %763 = vmatprep.subr.bf16.mxu0 0
      %764 = vmatpush1.bf16.msra.mxu0 0
      %765 = vmatprep.subr.bf16.mxu0 0
      %766 = vmatpush1.bf16.msra.mxu0 0
      %767 = vmatprep.subr.bf16.mxu0 0
      %768 = vmatpush1.bf16.msra.mxu0 0
      %769 = vmatprep.subr.bf16.mxu0 0
      %770 = vmatpush1.bf16.msra.mxu0 0
      %771 = vmatprep.subr.bf16.mxu0 0
      %772 = vmatpush1.bf16.msra.mxu0 0
      %773 = vmatprep.subr.bf16.mxu0 0
      %774 = vmatpush1.bf16.msra.mxu0 0
      %775 = vmatprep.subr.bf16.mxu0 0
      %776 = vmatpush1.bf16.msra.mxu0 0
      %777 = vmatprep.subr.bf16.mxu0 0
      %778 = vmatpush1.bf16.msra.mxu0 0
      %779 = vmatprep.mubr.bf16.mxu0 0
      %780 = vmatmul.mubr.bf16.gmra.mrb[0].mxu0 %v745
      %v781 = vpop.f32.mrb[0].mxu0
      %v782 = vadd.f32 0.0, %v781
      %v783 = vpop.f32.mrb[0].mxu0
      %v784 = vpop.f32.mrb[0].mxu0
      %v785 = vpop.f32.mrb[0].mxu0
      %786 = vdwg.mxu0
      %v787 = vadd.f32 %v737, %v782
      %v788 = vld [vmem:[%s742] sm:$0xf]
      %v789 = vld [vmem:[%s742 + $0x4] sm:$0x1]
      %v792 = vunpack.c.l.b16 %v788
      %v793 = vunpack.c.l.b16 %v789
      %v794 = vpack.c.b16 %v793, %v792
      %v796 = vshrl.u32 %v794, 16
      %v798 = vshll.u32 %v794, 16
      %v800 = vrot.slane %v798, 1
      %v801 = vor.u32 %v796, %v800
      %v803 = vsel %vm220, %v801, 0
      %805 = vmatprep.subr.bf16.mxu0 0
      %806 = vmatpush1.bf16.msra.mxu0 %v383
      %807 = vmatprep.subr.bf16.mxu0 0
      %808 = vmatpush1.bf16.msra.mxu0 0
      %809 = vmatprep.subr.bf16.mxu0 0
      %810 = vmatpush1.bf16.msra.mxu0 0
      %811 = vmatprep.subr.bf16.mxu0 0
      %812 = vmatpush1.bf16.msra.mxu0 0
      %813 = vmatprep.subr.bf16.mxu0 0
      %814 = vmatpush1.bf16.msra.mxu0 0
      %815 = vmatprep.subr.bf16.mxu0 0
      %816 = vmatpush1.bf16.msra.mxu0 0
      %817 = vmatprep.subr.bf16.mxu0 0
      %818 = vmatpush1.bf16.msra.mxu0 0
      %819 = vmatprep.subr.bf16.mxu0 0
      %820 = vmatpush1.bf16.msra.mxu0 0
      %821 = vmatprep.subr.bf16.mxu0 0
      %822 = vmatpush1.bf16.msra.mxu0 0
      %823 = vmatprep.subr.bf16.mxu0 0
      %824 = vmatpush1.bf16.msra.mxu0 0
      %825 = vmatprep.subr.bf16.mxu0 0
      %826 = vmatpush1.bf16.msra.mxu0 0
      %827 = vmatprep.subr.bf16.mxu0 0
      %828 = vmatpush1.bf16.msra.mxu0 0
      %829 = vmatprep.subr.bf16.mxu0 0
      %830 = vmatpush1.bf16.msra.mxu0 0
      %831 = vmatprep.subr.bf16.mxu0 0
      %832 = vmatpush1.bf16.msra.mxu0 0
      %833 = vmatprep.subr.bf16.mxu0 0
      %834 = vmatpush1.bf16.msra.mxu0 0
      %835 = vmatprep.subr.bf16.mxu0 0
      %836 = vmatpush1.bf16.msra.mxu0 0
      %837 = vmatprep.mubr.bf16.mxu0 0
      %838 = vmatmul.mubr.bf16.gmra.mrb[0].mxu0 %v803
      %v839 = vpop.f32.mrb[0].mxu0
      %v840 = vadd.f32 0.0, %v839
      %v841 = vpop.f32.mrb[0].mxu0
      %v842 = vpop.f32.mrb[0].mxu0
      %v843 = vpop.f32.mrb[0].mxu0
      %844 = vdwg.mxu0
      %v845 = vadd.f32 %v787, %v840
      %846 = vst.msk [vmem:[%s182 + $0x10] sm:$0xff] %vm429, %v845
      %v847 = vadd.f32 %v639, %v845
      %v848 = vmul.f32 %v845, %v845
      %v849 = vadd.f32 %v641, %v848
      %v850 = vld [vmem:[%s742] sm:$0xf]
      %v851 = vld [vmem:[%s742 + $0x4] sm:$0x1]
      %v854 = vunpack.c.l.b16 %v850
      %v855 = vunpack.c.l.b16 %v851
      %v856 = vpack.c.b16 %v855, %v854
      %v858 = vshrl.u32 %v856, 16
      %v860 = vshll.u32 %v856, 16
      %v862 = vrot.slane %v860, 1
      %v863 = vor.u32 %v858, %v862
      %v865 = vsel %vm220, %v863, 0
      %867 = vmatprep.subr.bf16.mxu0 0
      %868 = vmatpush1.bf16.msra.mxu0 %v218
      %869 = vmatprep.subr.bf16.mxu0 0
      %870 = vmatpush1.bf16.msra.mxu0 0
      %871 = vmatprep.subr.bf16.mxu0 0
      %872 = vmatpush1.bf16.msra.mxu0 0
      %873 = vmatprep.subr.bf16.mxu0 0
      %874 = vmatpush1.bf16.msra.mxu0 0
      %875 = vmatprep.subr.bf16.mxu0 0
      %876 = vmatpush1.bf16.msra.mxu0 0
      %877 = vmatprep.subr.bf16.mxu0 0
      %878 = vmatpush1.bf16.msra.mxu0 0
      %879 = vmatprep.subr.bf16.mxu0 0
      %880 = vmatpush1.bf16.msra.mxu0 0
      %881 = vmatprep.subr.bf16.mxu0 0
      %882 = vmatpush1.bf16.msra.mxu0 0
      %883 = vmatprep.subr.bf16.mxu0 0
      %884 = vmatpush1.bf16.msra.mxu0 0
      %885 = vmatprep.subr.bf16.mxu0 0
      %886 = vmatpush1.bf16.msra.mxu0 0
      %887 = vmatprep.subr.bf16.mxu0 0
      %888 = vmatpush1.bf16.msra.mxu0 0
      %889 = vmatprep.subr.bf16.mxu0 0
      %890 = vmatpush1.bf16.msra.mxu0 0
      %891 = vmatprep.subr.bf16.mxu0 0
      %892 = vmatpush1.bf16.msra.mxu0 0
      %893 = vmatprep.subr.bf16.mxu0 0
      %894 = vmatpush1.bf16.msra.mxu0 0
      %895 = vmatprep.subr.bf16.mxu0 0
      %896 = vmatpush1.bf16.msra.mxu0 0
      %897 = vmatprep.subr.bf16.mxu0 0
      %898 = vmatpush1.bf16.msra.mxu0 0
      %899 = vmatprep.mubr.bf16.mxu0 0
      %900 = vmatmul.mubr.bf16.gmra.mrb[0].mxu0 %v865
      %v901 = vpop.f32.mrb[0].mxu0
      %v902 = vadd.f32 0.0, %v901
      %v903 = vpop.f32.mrb[0].mxu0
      %v904 = vpop.f32.mrb[0].mxu0
      %v905 = vpop.f32.mrb[0].mxu0
      %906 = vdwg.mxu0
      %v908 = vsel %vm220, %v850, 0
      %910 = vmatprep.subr.bf16.mxu0 0
      %911 = vmatpush1.bf16.msra.mxu0 %v268
      %912 = vmatprep.subr.bf16.mxu0 0
      %913 = vmatpush1.bf16.msra.mxu0 0
      %914 = vmatprep.subr.bf16.mxu0 0
      %915 = vmatpush1.bf16.msra.mxu0 0
      %916 = vmatprep.subr.bf16.mxu0 0
      %917 = vmatpush1.bf16.msra.mxu0 0
      %918 = vmatprep.subr.bf16.mxu0 0
      %919 = vmatpush1.bf16.msra.mxu0 0
      %920 = vmatprep.subr.bf16.mxu0 0
      %921 = vmatpush1.bf16.msra.mxu0 0
      %922 = vmatprep.subr.bf16.mxu0 0
      %923 = vmatpush1.bf16.msra.mxu0 0
      %924 = vmatprep.subr.bf16.mxu0 0
      %925 = vmatpush1.bf16.msra.mxu0 0
      %926 = vmatprep.subr.bf16.mxu0 0
      %927 = vmatpush1.bf16.msra.mxu0 0
      %928 = vmatprep.subr.bf16.mxu0 0
      %929 = vmatpush1.bf16.msra.mxu0 0
      %930 = vmatprep.subr.bf16.mxu0 0
      %931 = vmatpush1.bf16.msra.mxu0 0
      %932 = vmatprep.subr.bf16.mxu0 0
      %933 = vmatpush1.bf16.msra.mxu0 0
      %934 = vmatprep.subr.bf16.mxu0 0
      %935 = vmatpush1.bf16.msra.mxu0 0
      %936 = vmatprep.subr.bf16.mxu0 0
      %937 = vmatpush1.bf16.msra.mxu0 0
      %938 = vmatprep.subr.bf16.mxu0 0
      %939 = vmatpush1.bf16.msra.mxu0 0
      %940 = vmatprep.subr.bf16.mxu0 0
      %941 = vmatpush1.bf16.msra.mxu0 0
      %942 = vmatprep.mubr.bf16.mxu0 0
      %943 = vmatmul.mubr.bf16.gmra.mrb[0].mxu0 %v908
      %v944 = vpop.f32.mrb[0].mxu0
      %v945 = vadd.f32 %v902, %v944
      %v946 = vpop.f32.mrb[0].mxu0
      %v947 = vpop.f32.mrb[0].mxu0
      %v948 = vpop.f32.mrb[0].mxu0
      %949 = vdwg.mxu0
      %s950 = scalar_lea.vmem %s176, 32
      %v951 = vld [vmem:[%s950] sm:$0xf]
      %v953 = vsel %vm220, %v951, 0
      %955 = vmatprep.subr.bf16.mxu0 0
      %956 = vmatpush1.bf16.msra.mxu0 %v319
      %957 = vmatprep.subr.bf16.mxu0 0
      %958 = vmatpush1.bf16.msra.mxu0 0
      %959 = vmatprep.subr.bf16.mxu0 0
      %960 = vmatpush1.bf16.msra.mxu0 0
      %961 = vmatprep.subr.bf16.mxu0 0
      %962 = vmatpush1.bf16.msra.mxu0 0
      %963 = vmatprep.subr.bf16.mxu0 0
      %964 = vmatpush1.bf16.msra.mxu0 0
      %965 = vmatprep.subr.bf16.mxu0 0
      %966 = vmatpush1.bf16.msra.mxu0 0
      %967 = vmatprep.subr.bf16.mxu0 0
      %968 = vmatpush1.bf16.msra.mxu0 0
      %969 = vmatprep.subr.bf16.mxu0 0
      %970 = vmatpush1.bf16.msra.mxu0 0
      %971 = vmatprep.subr.bf16.mxu0 0
      %972 = vmatpush1.bf16.msra.mxu0 0
      %973 = vmatprep.subr.bf16.mxu0 0
      %974 = vmatpush1.bf16.msra.mxu0 0
      %975 = vmatprep.subr.bf16.mxu0 0
      %976 = vmatpush1.bf16.msra.mxu0 0
      %977 = vmatprep.subr.bf16.mxu0 0
      %978 = vmatpush1.bf16.msra.mxu0 0
      %979 = vmatprep.subr.bf16.mxu0 0
      %980 = vmatpush1.bf16.msra.mxu0 0
      %981 = vmatprep.subr.bf16.mxu0 0
      %982 = vmatpush1.bf16.msra.mxu0 0
      %983 = vmatprep.subr.bf16.mxu0 0
      %984 = vmatpush1.bf16.msra.mxu0 0
      %985 = vmatprep.subr.bf16.mxu0 0
      %986 = vmatpush1.bf16.msra.mxu0 0
      %987 = vmatprep.mubr.bf16.mxu0 0
      %988 = vmatmul.mubr.bf16.gmra.mrb[0].mxu0 %v953
      %v989 = vpop.f32.mrb[0].mxu0
      %v990 = vadd.f32 0.0, %v989
      %v991 = vpop.f32.mrb[0].mxu0
      %v992 = vpop.f32.mrb[0].mxu0
      %v993 = vpop.f32.mrb[0].mxu0
      %994 = vdwg.mxu0
      %v995 = vadd.f32 %v945, %v990
      %v996 = vld [vmem:[%s950] sm:$0xf]
      %v997 = vld [vmem:[%s950 + $0x4] sm:$0x1]
      %v1000 = vunpack.c.l.b16 %v996
      %v1001 = vunpack.c.l.b16 %v997
      %v1002 = vpack.c.b16 %v1001, %v1000
      %v1004 = vshrl.u32 %v1002, 16
      %v1006 = vshll.u32 %v1002, 16
      %v1008 = vrot.slane %v1006, 1
      %v1009 = vor.u32 %v1004, %v1008
      %v1011 = vsel %vm220, %v1009, 0
      %1013 = vmatprep.subr.bf16.mxu0 0
      %1014 = vmatpush1.bf16.msra.mxu0 %v383
      %1015 = vmatprep.subr.bf16.mxu0 0
      %1016 = vmatpush1.bf16.msra.mxu0 0
      %1017 = vmatprep.subr.bf16.mxu0 0
      %1018 = vmatpush1.bf16.msra.mxu0 0
      %1019 = vmatprep.subr.bf16.mxu0 0
      %1020 = vmatpush1.bf16.msra.mxu0 0
      %1021 = vmatprep.subr.bf16.mxu0 0
      %1022 = vmatpush1.bf16.msra.mxu0 0
      %1023 = vmatprep.subr.bf16.mxu0 0
      %1024 = vmatpush1.bf16.msra.mxu0 0
      %1025 = vmatprep.subr.bf16.mxu0 0
      %1026 = vmatpush1.bf16.msra.mxu0 0
      %1027 = vmatprep.subr.bf16.mxu0 0
      %1028 = vmatpush1.bf16.msra.mxu0 0
      %1029 = vmatprep.subr.bf16.mxu0 0
      %1030 = vmatpush1.bf16.msra.mxu0 0
      %1031 = vmatprep.subr.bf16.mxu0 0
      %1032 = vmatpush1.bf16.msra.mxu0 0
      %1033 = vmatprep.subr.bf16.mxu0 0
      %1034 = vmatpush1.bf16.msra.mxu0 0
      %1035 = vmatprep.subr.bf16.mxu0 0
      %1036 = vmatpush1.bf16.msra.mxu0 0
      %1037 = vmatprep.subr.bf16.mxu0 0
      %1038 = vmatpush1.bf16.msra.mxu0 0
      %1039 = vmatprep.subr.bf16.mxu0 0
      %1040 = vmatpush1.bf16.msra.mxu0 0
      %1041 = vmatprep.subr.bf16.mxu0 0
      %1042 = vmatpush1.bf16.msra.mxu0 0
      %1043 = vmatprep.subr.bf16.mxu0 0
      %1044 = vmatpush1.bf16.msra.mxu0 0
      %1045 = vmatprep.mubr.bf16.mxu0 0
      %1046 = vmatmul.mubr.bf16.gmra.mrb[0].mxu0 %v1011
      %v1047 = vpop.f32.mrb[0].mxu0
      %v1048 = vadd.f32 0.0, %v1047
      %v1049 = vpop.f32.mrb[0].mxu0
      %v1050 = vpop.f32.mrb[0].mxu0
      %v1051 = vpop.f32.mrb[0].mxu0
      %1052 = vdwg.mxu0
      %v1053 = vadd.f32 %v995, %v1048
      %1054 = vst.msk [vmem:[%s182 + $0x18] sm:$0xff] %vm429, %v1053
      %v1055 = vadd.f32 %v847, %v1053
      %v1056 = vmul.f32 %v1053, %v1053
      %v1057 = vadd.f32 %v849, %v1056
      %v1058 = vld [vmem:[%s950] sm:$0xf]
      %v1059 = vld [vmem:[%s950 + $0x4] sm:$0x1]
      %v1062 = vunpack.c.l.b16 %v1058
      %v1063 = vunpack.c.l.b16 %v1059
      %v1064 = vpack.c.b16 %v1063, %v1062
      %v1066 = vshrl.u32 %v1064, 16
      %v1068 = vshll.u32 %v1064, 16
      %v1070 = vrot.slane %v1068, 1
      %v1071 = vor.u32 %v1066, %v1070
      %v1073 = vsel %vm220, %v1071, 0
      %1075 = vmatprep.subr.bf16.mxu0 0
      %1076 = vmatpush1.bf16.msra.mxu0 %v218
      %1077 = vmatprep.subr.bf16.mxu0 0
      %1078 = vmatpush1.bf16.msra.mxu0 0
      %1079 = vmatprep.subr.bf16.mxu0 0
      %1080 = vmatpush1.bf16.msra.mxu0 0
      %1081 = vmatprep.subr.bf16.mxu0 0
      %1082 = vmatpush1.bf16.msra.mxu0 0
      %1083 = vmatprep.subr.bf16.mxu0 0
      %1084 = vmatpush1.bf16.msra.mxu0 0
      %1085 = vmatprep.subr.bf16.mxu0 0
      %1086 = vmatpush1.bf16.msra.mxu0 0
      %1087 = vmatprep.subr.bf16.mxu0 0
      %1088 = vmatpush1.bf16.msra.mxu0 0
      %1089 = vmatprep.subr.bf16.mxu0 0
      %1090 = vmatpush1.bf16.msra.mxu0 0
      %1091 = vmatprep.subr.bf16.mxu0 0
      %1092 = vmatpush1.bf16.msra.mxu0 0
      %1093 = vmatprep.subr.bf16.mxu0 0
      %1094 = vmatpush1.bf16.msra.mxu0 0
      %1095 = vmatprep.subr.bf16.mxu0 0
      %1096 = vmatpush1.bf16.msra.mxu0 0
      %1097 = vmatprep.subr.bf16.mxu0 0
      %1098 = vmatpush1.bf16.msra.mxu0 0
      %1099 = vmatprep.subr.bf16.mxu0 0
      %1100 = vmatpush1.bf16.msra.mxu0 0
      %1101 = vmatprep.subr.bf16.mxu0 0
      %1102 = vmatpush1.bf16.msra.mxu0 0
      %1103 = vmatprep.subr.bf16.mxu0 0
      %1104 = vmatpush1.bf16.msra.mxu0 0
      %1105 = vmatprep.subr.bf16.mxu0 0
      %1106 = vmatpush1.bf16.msra.mxu0 0
      %1107 = vmatprep.mubr.bf16.mxu0 0
      %1108 = vmatmul.mubr.bf16.gmra.mrb[0].mxu0 %v1073
      %v1109 = vpop.f32.mrb[0].mxu0
      %v1110 = vadd.f32 0.0, %v1109
      %v1111 = vpop.f32.mrb[0].mxu0
      %v1112 = vpop.f32.mrb[0].mxu0
      %v1113 = vpop.f32.mrb[0].mxu0
      %1114 = vdwg.mxu0
      %v1116 = vsel %vm220, %v1058, 0
      %1118 = vmatprep.subr.bf16.mxu0 0
      %1119 = vmatpush1.bf16.msra.mxu0 %v268
      %1120 = vmatprep.subr.bf16.mxu0 0
      %1121 = vmatpush1.bf16.msra.mxu0 0
      %1122 = vmatprep.subr.bf16.mxu0 0
      %1123 = vmatpush1.bf16.msra.mxu0 0
      %1124 = vmatprep.subr.bf16.mxu0 0
      %1125 = vmatpush1.bf16.msra.mxu0 0
      %1126 = vmatprep.subr.bf16.mxu0 0
      %1127 = vmatpush1.bf16.msra.mxu0 0
      %1128 = vmatprep.subr.bf16.mxu0 0
      %1129 = vmatpush1.bf16.msra.mxu0 0
      %1130 = vmatprep.subr.bf16.mxu0 0
      %1131 = vmatpush1.bf16.msra.mxu0 0
      %1132 = vmatprep.subr.bf16.mxu0 0
      %1133 = vmatpush1.bf16.msra.mxu0 0
      %1134 = vmatprep.subr.bf16.mxu0 0
      %1135 = vmatpush1.bf16.msra.mxu0 0
      %1136 = vmatprep.subr.bf16.mxu0 0
      %1137 = vmatpush1.bf16.msra.mxu0 0
      %1138 = vmatprep.subr.bf16.mxu0 0
      %1139 = vmatpush1.bf16.msra.mxu0 0
      %1140 = vmatprep.subr.bf16.mxu0 0
      %1141 = vmatpush1.bf16.msra.mxu0 0
      %1142 = vmatprep.subr.bf16.mxu0 0
      %1143 = vmatpush1.bf16.msra.mxu0 0
      %1144 = vmatprep.subr.bf16.mxu0 0
      %1145 = vmatpush1.bf16.msra.mxu0 0
      %1146 = vmatprep.subr.bf16.mxu0 0
      %1147 = vmatpush1.bf16.msra.mxu0 0
      %1148 = vmatprep.subr.bf16.mxu0 0
      %1149 = vmatpush1.bf16.msra.mxu0 0
      %1150 = vmatprep.mubr.bf16.mxu0 0
      %1151 = vmatmul.mubr.bf16.gmra.mrb[0].mxu0 %v1116
      %v1152 = vpop.f32.mrb[0].mxu0
      %v1153 = vadd.f32 %v1110, %v1152
      %v1154 = vpop.f32.mrb[0].mxu0
      %v1155 = vpop.f32.mrb[0].mxu0
      %v1156 = vpop.f32.mrb[0].mxu0
      %1157 = vdwg.mxu0
      %s1158 = scalar_lea.vmem %s176, 40
      %v1159 = vld [vmem:[%s1158] sm:$0xf]
      %v1161 = vsel %vm220, %v1159, 0
      %1163 = vmatprep.subr.bf16.mxu0 0
      %1164 = vmatpush1.bf16.msra.mxu0 %v319
      %1165 = vmatprep.subr.bf16.mxu0 0
      %1166 = vmatpush1.bf16.msra.mxu0 0
      %1167 = vmatprep.subr.bf16.mxu0 0
      %1168 = vmatpush1.bf16.msra.mxu0 0
      %1169 = vmatprep.subr.bf16.mxu0 0
      %1170 = vmatpush1.bf16.msra.mxu0 0
      %1171 = vmatprep.subr.bf16.mxu0 0
      %1172 = vmatpush1.bf16.msra.mxu0 0
      %1173 = vmatprep.subr.bf16.mxu0 0
      %1174 = vmatpush1.bf16.msra.mxu0 0
      %1175 = vmatprep.subr.bf16.mxu0 0
      %1176 = vmatpush1.bf16.msra.mxu0 0
      %1177 = vmatprep.subr.bf16.mxu0 0
      %1178 = vmatpush1.bf16.msra.mxu0 0
      %1179 = vmatprep.subr.bf16.mxu0 0
      %1180 = vmatpush1.bf16.msra.mxu0 0
      %1181 = vmatprep.subr.bf16.mxu0 0
      %1182 = vmatpush1.bf16.msra.mxu0 0
      %1183 = vmatprep.subr.bf16.mxu0 0
      %1184 = vmatpush1.bf16.msra.mxu0 0
      %1185 = vmatprep.subr.bf16.mxu0 0
      %1186 = vmatpush1.bf16.msra.mxu0 0
      %1187 = vmatprep.subr.bf16.mxu0 0
      %1188 = vmatpush1.bf16.msra.mxu0 0
      %1189 = vmatprep.subr.bf16.mxu0 0
      %1190 = vmatpush1.bf16.msra.mxu0 0
      %1191 = vmatprep.subr.bf16.mxu0 0
      %1192 = vmatpush1.bf16.msra.mxu0 0
      %1193 = vmatprep.subr.bf16.mxu0 0
      %1194 = vmatpush1.bf16.msra.mxu0 0
      %1195 = vmatprep.mubr.bf16.mxu0 0
      %1196 = vmatmul.mubr.bf16.gmra.mrb[0].mxu0 %v1161
      %v1197 = vpop.f32.mrb[0].mxu0
      %v1198 = vadd.f32 0.0, %v1197
      %v1199 = vpop.f32.mrb[0].mxu0
      %v1200 = vpop.f32.mrb[0].mxu0
      %v1201 = vpop.f32.mrb[0].mxu0
      %1202 = vdwg.mxu0
      %v1203 = vadd.f32 %v1153, %v1198
      %v1204 = vld [vmem:[%s1158] sm:$0xf]
      %v1205 = vld [vmem:[%s1158 + $0x4] sm:$0x1]
      %v1208 = vunpack.c.l.b16 %v1204
      %v1209 = vunpack.c.l.b16 %v1205
      %v1210 = vpack.c.b16 %v1209, %v1208
      %v1212 = vshrl.u32 %v1210, 16
      %v1214 = vshll.u32 %v1210, 16
      %v1216 = vrot.slane %v1214, 1
      %v1217 = vor.u32 %v1212, %v1216
      %v1219 = vsel %vm220, %v1217, 0
      %1221 = vmatprep.subr.bf16.mxu0 0
      %1222 = vmatpush1.bf16.msra.mxu0 %v383
      %1223 = vmatprep.subr.bf16.mxu0 0
      %1224 = vmatpush1.bf16.msra.mxu0 0
      %1225 = vmatprep.subr.bf16.mxu0 0
      %1226 = vmatpush1.bf16.msra.mxu0 0
      %1227 = vmatprep.subr.bf16.mxu0 0
      %1228 = vmatpush1.bf16.msra.mxu0 0
      %1229 = vmatprep.subr.bf16.mxu0 0
      %1230 = vmatpush1.bf16.msra.mxu0 0
      %1231 = vmatprep.subr.bf16.mxu0 0
      %1232 = vmatpush1.bf16.msra.mxu0 0
      %1233 = vmatprep.subr.bf16.mxu0 0
      %1234 = vmatpush1.bf16.msra.mxu0 0
      %1235 = vmatprep.subr.bf16.mxu0 0
      %1236 = vmatpush1.bf16.msra.mxu0 0
      %1237 = vmatprep.subr.bf16.mxu0 0
      %1238 = vmatpush1.bf16.msra.mxu0 0
      %1239 = vmatprep.subr.bf16.mxu0 0
      %1240 = vmatpush1.bf16.msra.mxu0 0
      %1241 = vmatprep.subr.bf16.mxu0 0
      %1242 = vmatpush1.bf16.msra.mxu0 0
      %1243 = vmatprep.subr.bf16.mxu0 0
      %1244 = vmatpush1.bf16.msra.mxu0 0
      %1245 = vmatprep.subr.bf16.mxu0 0
      %1246 = vmatpush1.bf16.msra.mxu0 0
      %1247 = vmatprep.subr.bf16.mxu0 0
      %1248 = vmatpush1.bf16.msra.mxu0 0
      %1249 = vmatprep.subr.bf16.mxu0 0
      %1250 = vmatpush1.bf16.msra.mxu0 0
      %1251 = vmatprep.subr.bf16.mxu0 0
      %1252 = vmatpush1.bf16.msra.mxu0 0
      %1253 = vmatprep.mubr.bf16.mxu0 0
      %1254 = vmatmul.mubr.bf16.gmra.mrb[0].mxu0 %v1219
      %v1255 = vpop.f32.mrb[0].mxu0
      %v1256 = vadd.f32 0.0, %v1255
      %v1257 = vpop.f32.mrb[0].mxu0
      %v1258 = vpop.f32.mrb[0].mxu0
      %v1259 = vpop.f32.mrb[0].mxu0
      %1260 = vdwg.mxu0
      %v1261 = vadd.f32 %v1203, %v1256
      %1262 = vst.msk [vmem:[%s182 + $0x20] sm:$0xff] %vm429, %v1261
      %v1263 = vadd.f32 %v1055, %v1261
      %v1264 = vmul.f32 %v1261, %v1261
      %v1265 = vadd.f32 %v1057, %v1264
      %v1266 = vld [vmem:[%s1158] sm:$0xf]
      %v1267 = vld [vmem:[%s1158 + $0x4] sm:$0x1]
      %v1270 = vunpack.c.l.b16 %v1266
      %v1271 = vunpack.c.l.b16 %v1267
      %v1272 = vpack.c.b16 %v1271, %v1270
      %v1274 = vshrl.u32 %v1272, 16
      %v1276 = vshll.u32 %v1272, 16
      %v1278 = vrot.slane %v1276, 1
      %v1279 = vor.u32 %v1274, %v1278
      %v1281 = vsel %vm220, %v1279, 0
      %1283 = vmatprep.subr.bf16.mxu0 0
      %1284 = vmatpush1.bf16.msra.mxu0 %v218
      %1285 = vmatprep.subr.bf16.mxu0 0
      %1286 = vmatpush1.bf16.msra.mxu0 0
      %1287 = vmatprep.subr.bf16.mxu0 0
      %1288 = vmatpush1.bf16.msra.mxu0 0
      %1289 = vmatprep.subr.bf16.mxu0 0
      %1290 = vmatpush1.bf16.msra.mxu0 0
      %1291 = vmatprep.subr.bf16.mxu0 0
      %1292 = vmatpush1.bf16.msra.mxu0 0
      %1293 = vmatprep.subr.bf16.mxu0 0
      %1294 = vmatpush1.bf16.msra.mxu0 0
      %1295 = vmatprep.subr.bf16.mxu0 0
      %1296 = vmatpush1.bf16.msra.mxu0 0
      %1297 = vmatprep.subr.bf16.mxu0 0
      %1298 = vmatpush1.bf16.msra.mxu0 0
      %1299 = vmatprep.subr.bf16.mxu0 0
      %1300 = vmatpush1.bf16.msra.mxu0 0
      %1301 = vmatprep.subr.bf16.mxu0 0
      %1302 = vmatpush1.bf16.msra.mxu0 0
      %1303 = vmatprep.subr.bf16.mxu0 0
      %1304 = vmatpush1.bf16.msra.mxu0 0
      %1305 = vmatprep.subr.bf16.mxu0 0
      %1306 = vmatpush1.bf16.msra.mxu0 0
      %1307 = vmatprep.subr.bf16.mxu0 0
      %1308 = vmatpush1.bf16.msra.mxu0 0
      %1309 = vmatprep.subr.bf16.mxu0 0
      %1310 = vmatpush1.bf16.msra.mxu0 0
      %1311 = vmatprep.subr.bf16.mxu0 0
      %1312 = vmatpush1.bf16.msra.mxu0 0
      %1313 = vmatprep.subr.bf16.mxu0 0
      %1314 = vmatpush1.bf16.msra.mxu0 0
      %1315 = vmatprep.mubr.bf16.mxu0 0
      %1316 = vmatmul.mubr.bf16.gmra.mrb[0].mxu0 %v1281
      %v1317 = vpop.f32.mrb[0].mxu0
      %v1318 = vadd.f32 0.0, %v1317
      %v1319 = vpop.f32.mrb[0].mxu0
      %v1320 = vpop.f32.mrb[0].mxu0
      %v1321 = vpop.f32.mrb[0].mxu0
      %1322 = vdwg.mxu0
      %v1324 = vsel %vm220, %v1266, 0
      %1326 = vmatprep.subr.bf16.mxu0 0
      %1327 = vmatpush1.bf16.msra.mxu0 %v268
      %1328 = vmatprep.subr.bf16.mxu0 0
      %1329 = vmatpush1.bf16.msra.mxu0 0
      %1330 = vmatprep.subr.bf16.mxu0 0
      %1331 = vmatpush1.bf16.msra.mxu0 0
      %1332 = vmatprep.subr.bf16.mxu0 0
      %1333 = vmatpush1.bf16.msra.mxu0 0
      %1334 = vmatprep.subr.bf16.mxu0 0
      %1335 = vmatpush1.bf16.msra.mxu0 0
      %1336 = vmatprep.subr.bf16.mxu0 0
      %1337 = vmatpush1.bf16.msra.mxu0 0
      %1338 = vmatprep.subr.bf16.mxu0 0
      %1339 = vmatpush1.bf16.msra.mxu0 0
      %1340 = vmatprep.subr.bf16.mxu0 0
      %1341 = vmatpush1.bf16.msra.mxu0 0
      %1342 = vmatprep.subr.bf16.mxu0 0
      %1343 = vmatpush1.bf16.msra.mxu0 0
      %1344 = vmatprep.subr.bf16.mxu0 0
      %1345 = vmatpush1.bf16.msra.mxu0 0
      %1346 = vmatprep.subr.bf16.mxu0 0
      %1347 = vmatpush1.bf16.msra.mxu0 0
      %1348 = vmatprep.subr.bf16.mxu0 0
      %1349 = vmatpush1.bf16.msra.mxu0 0
      %1350 = vmatprep.subr.bf16.mxu0 0
      %1351 = vmatpush1.bf16.msra.mxu0 0
      %1352 = vmatprep.subr.bf16.mxu0 0
      %1353 = vmatpush1.bf16.msra.mxu0 0
      %1354 = vmatprep.subr.bf16.mxu0 0
      %1355 = vmatpush1.bf16.msra.mxu0 0
      %1356 = vmatprep.subr.bf16.mxu0 0
      %1357 = vmatpush1.bf16.msra.mxu0 0
      %1358 = vmatprep.mubr.bf16.mxu0 0
      %1359 = vmatmul.mubr.bf16.gmra.mrb[0].mxu0 %v1324
      %v1360 = vpop.f32.mrb[0].mxu0
      %v1361 = vadd.f32 %v1318, %v1360
      %v1362 = vpop.f32.mrb[0].mxu0
      %v1363 = vpop.f32.mrb[0].mxu0
      %v1364 = vpop.f32.mrb[0].mxu0
      %1365 = vdwg.mxu0
      %s1366 = scalar_lea.vmem %s176, 48
      %v1367 = vld [vmem:[%s1366] sm:$0xf]
      %v1369 = vsel %vm220, %v1367, 0
      %1371 = vmatprep.subr.bf16.mxu0 0
      %1372 = vmatpush1.bf16.msra.mxu0 %v319
      %1373 = vmatprep.subr.bf16.mxu0 0
      %1374 = vmatpush1.bf16.msra.mxu0 0
      %1375 = vmatprep.subr.bf16.mxu0 0
      %1376 = vmatpush1.bf16.msra.mxu0 0
      %1377 = vmatprep.subr.bf16.mxu0 0
      %1378 = vmatpush1.bf16.msra.mxu0 0
      %1379 = vmatprep.subr.bf16.mxu0 0
      %1380 = vmatpush1.bf16.msra.mxu0 0
      %1381 = vmatprep.subr.bf16.mxu0 0
      %1382 = vmatpush1.bf16.msra.mxu0 0
      %1383 = vmatprep.subr.bf16.mxu0 0
      %1384 = vmatpush1.bf16.msra.mxu0 0
      %1385 = vmatprep.subr.bf16.mxu0 0
      %1386 = vmatpush1.bf16.msra.mxu0 0
      %1387 = vmatprep.subr.bf16.mxu0 0
      %1388 = vmatpush1.bf16.msra.mxu0 0
      %1389 = vmatprep.subr.bf16.mxu0 0
      %1390 = vmatpush1.bf16.msra.mxu0 0
      %1391 = vmatprep.subr.bf16.mxu0 0
      %1392 = vmatpush1.bf16.msra.mxu0 0
      %1393 = vmatprep.subr.bf16.mxu0 0
      %1394 = vmatpush1.bf16.msra.mxu0 0
      %1395 = vmatprep.subr.bf16.mxu0 0
      %1396 = vmatpush1.bf16.msra.mxu0 0
      %1397 = vmatprep.subr.bf16.mxu0 0
      %1398 = vmatpush1.bf16.msra.mxu0 0
      %1399 = vmatprep.subr.bf16.mxu0 0
      %1400 = vmatpush1.bf16.msra.mxu0 0
      %1401 = vmatprep.subr.bf16.mxu0 0
      %1402 = vmatpush1.bf16.msra.mxu0 0
      %1403 = vmatprep.mubr.bf16.mxu0 0
      %1404 = vmatmul.mubr.bf16.gmra.mrb[0].mxu0 %v1369
      %v1405 = vpop.f32.mrb[0].mxu0
      %v1406 = vadd.f32 0.0, %v1405
      %v1407 = vpop.f32.mrb[0].mxu0
      %v1408 = vpop.f32.mrb[0].mxu0
      %v1409 = vpop.f32.mrb[0].mxu0
      %1410 = vdwg.mxu0
      %v1411 = vadd.f32 %v1361, %v1406
      %v1412 = vld [vmem:[%s1366] sm:$0xf]
      %v1413 = vld [vmem:[%s1366 + $0x4] sm:$0x1]
      %v1416 = vunpack.c.l.b16 %v1412
      %v1417 = vunpack.c.l.b16 %v1413
      %v1418 = vpack.c.b16 %v1417, %v1416
      %v1420 = vshrl.u32 %v1418, 16
      %v1422 = vshll.u32 %v1418, 16
      %v1424 = vrot.slane %v1422, 1
      %v1425 = vor.u32 %v1420, %v1424
      %v1427 = vsel %vm220, %v1425, 0
      %1429 = vmatprep.subr.bf16.mxu0 0
      %1430 = vmatpush1.bf16.msra.mxu0 %v383
      %1431 = vmatprep.subr.bf16.mxu0 0
      %1432 = vmatpush1.bf16.msra.mxu0 0
      %1433 = vmatprep.subr.bf16.mxu0 0
      %1434 = vmatpush1.bf16.msra.mxu0 0
      %1435 = vmatprep.subr.bf16.mxu0 0
      %1436 = vmatpush1.bf16.msra.mxu0 0
      %1437 = vmatprep.subr.bf16.mxu0 0
      %1438 = vmatpush1.bf16.msra.mxu0 0
      %1439 = vmatprep.subr.bf16.mxu0 0
      %1440 = vmatpush1.bf16.msra.mxu0 0
      %1441 = vmatprep.subr.bf16.mxu0 0
      %1442 = vmatpush1.bf16.msra.mxu0 0
      %1443 = vmatprep.subr.bf16.mxu0 0
      %1444 = vmatpush1.bf16.msra.mxu0 0
      %1445 = vmatprep.subr.bf16.mxu0 0
      %1446 = vmatpush1.bf16.msra.mxu0 0
      %1447 = vmatprep.subr.bf16.mxu0 0
      %1448 = vmatpush1.bf16.msra.mxu0 0
      %1449 = vmatprep.subr.bf16.mxu0 0
      %1450 = vmatpush1.bf16.msra.mxu0 0
      %1451 = vmatprep.subr.bf16.mxu0 0
      %1452 = vmatpush1.bf16.msra.mxu0 0
      %1453 = vmatprep.subr.bf16.mxu0 0
      %1454 = vmatpush1.bf16.msra.mxu0 0
      %1455 = vmatprep.subr.bf16.mxu0 0
      %1456 = vmatpush1.bf16.msra.mxu0 0
      %1457 = vmatprep.subr.bf16.mxu0 0
      %1458 = vmatpush1.bf16.msra.mxu0 0
      %1459 = vmatprep.subr.bf16.mxu0 0
      %1460 = vmatpush1.bf16.msra.mxu0 0
      %1461 = vmatprep.mubr.bf16.mxu0 0
      %1462 = vmatmul.mubr.bf16.gmra.mrb[0].mxu0 %v1427
      %v1463 = vpop.f32.mrb[0].mxu0
      %v1464 = vadd.f32 0.0, %v1463
      %v1465 = vpop.f32.mrb[0].mxu0
      %v1466 = vpop.f32.mrb[0].mxu0
      %v1467 = vpop.f32.mrb[0].mxu0
      %1468 = vdwg.mxu0
      %v1469 = vadd.f32 %v1411, %v1464
      %1470 = vst.msk [vmem:[%s182 + $0x28] sm:$0xff] %vm429, %v1469
      %v1471 = vadd.f32 %v1263, %v1469
      %v1472 = vmul.f32 %v1469, %v1469
      %v1473 = vadd.f32 %v1265, %v1472
      %v1474 = vld [vmem:[%s1366] sm:$0xf]
      %v1475 = vld [vmem:[%s1366 + $0x4] sm:$0x1]
      %v1478 = vunpack.c.l.b16 %v1474
      %v1479 = vunpack.c.l.b16 %v1475
      %v1480 = vpack.c.b16 %v1479, %v1478
      %v1482 = vshrl.u32 %v1480, 16
      %v1484 = vshll.u32 %v1480, 16
      %v1486 = vrot.slane %v1484, 1
      %v1487 = vor.u32 %v1482, %v1486
      %v1489 = vsel %vm220, %v1487, 0
      %1491 = vmatprep.subr.bf16.mxu0 0
      %1492 = vmatpush1.bf16.msra.mxu0 %v218
      %1493 = vmatprep.subr.bf16.mxu0 0
      %1494 = vmatpush1.bf16.msra.mxu0 0
      %1495 = vmatprep.subr.bf16.mxu0 0
      %1496 = vmatpush1.bf16.msra.mxu0 0
      %1497 = vmatprep.subr.bf16.mxu0 0
      %1498 = vmatpush1.bf16.msra.mxu0 0
      %1499 = vmatprep.subr.bf16.mxu0 0
      %1500 = vmatpush1.bf16.msra.mxu0 0
      %1501 = vmatprep.subr.bf16.mxu0 0
      %1502 = vmatpush1.bf16.msra.mxu0 0
      %1503 = vmatprep.subr.bf16.mxu0 0
      %1504 = vmatpush1.bf16.msra.mxu0 0
      %1505 = vmatprep.subr.bf16.mxu0 0
      %1506 = vmatpush1.bf16.msra.mxu0 0
      %1507 = vmatprep.subr.bf16.mxu0 0
      %1508 = vmatpush1.bf16.msra.mxu0 0
      %1509 = vmatprep.subr.bf16.mxu0 0
      %1510 = vmatpush1.bf16.msra.mxu0 0
      %1511 = vmatprep.subr.bf16.mxu0 0
      %1512 = vmatpush1.bf16.msra.mxu0 0
      %1513 = vmatprep.subr.bf16.mxu0 0
      %1514 = vmatpush1.bf16.msra.mxu0 0
      %1515 = vmatprep.subr.bf16.mxu0 0
      %1516 = vmatpush1.bf16.msra.mxu0 0
      %1517 = vmatprep.subr.bf16.mxu0 0
      %1518 = vmatpush1.bf16.msra.mxu0 0
      %1519 = vmatprep.subr.bf16.mxu0 0
      %1520 = vmatpush1.bf16.msra.mxu0 0
      %1521 = vmatprep.subr.bf16.mxu0 0
      %1522 = vmatpush1.bf16.msra.mxu0 0
      %1523 = vmatprep.mubr.bf16.mxu0 0
      %1524 = vmatmul.mubr.bf16.gmra.mrb[0].mxu0 %v1489
      %v1525 = vpop.f32.mrb[0].mxu0
      %v1526 = vadd.f32 0.0, %v1525
      %v1527 = vpop.f32.mrb[0].mxu0
      %v1528 = vpop.f32.mrb[0].mxu0
      %v1529 = vpop.f32.mrb[0].mxu0
      %1530 = vdwg.mxu0
      %v1532 = vsel %vm220, %v1474, 0
      %1534 = vmatprep.subr.bf16.mxu0 0
      %1535 = vmatpush1.bf16.msra.mxu0 %v268
      %1536 = vmatprep.subr.bf16.mxu0 0
      %1537 = vmatpush1.bf16.msra.mxu0 0
      %1538 = vmatprep.subr.bf16.mxu0 0
      %1539 = vmatpush1.bf16.msra.mxu0 0
      %1540 = vmatprep.subr.bf16.mxu0 0
      %1541 = vmatpush1.bf16.msra.mxu0 0
      %1542 = vmatprep.subr.bf16.mxu0 0
      %1543 = vmatpush1.bf16.msra.mxu0 0
      %1544 = vmatprep.subr.bf16.mxu0 0
      %1545 = vmatpush1.bf16.msra.mxu0 0
      %1546 = vmatprep.subr.bf16.mxu0 0
      %1547 = vmatpush1.bf16.msra.mxu0 0
      %1548 = vmatprep.subr.bf16.mxu0 0
      %1549 = vmatpush1.bf16.msra.mxu0 0
      %1550 = vmatprep.subr.bf16.mxu0 0
      %1551 = vmatpush1.bf16.msra.mxu0 0
      %1552 = vmatprep.subr.bf16.mxu0 0
      %1553 = vmatpush1.bf16.msra.mxu0 0
      %1554 = vmatprep.subr.bf16.mxu0 0
      %1555 = vmatpush1.bf16.msra.mxu0 0
      %1556 = vmatprep.subr.bf16.mxu0 0
      %1557 = vmatpush1.bf16.msra.mxu0 0
      %1558 = vmatprep.subr.bf16.mxu0 0
      %1559 = vmatpush1.bf16.msra.mxu0 0
      %1560 = vmatprep.subr.bf16.mxu0 0
      %1561 = vmatpush1.bf16.msra.mxu0 0
      %1562 = vmatprep.subr.bf16.mxu0 0
      %1563 = vmatpush1.bf16.msra.mxu0 0
      %1564 = vmatprep.subr.bf16.mxu0 0
      %1565 = vmatpush1.bf16.msra.mxu0 0
      %1566 = vmatprep.mubr.bf16.mxu0 0
      %1567 = vmatmul.mubr.bf16.gmra.mrb[0].mxu0 %v1532
      %v1568 = vpop.f32.mrb[0].mxu0
      %v1569 = vadd.f32 %v1526, %v1568
      %v1570 = vpop.f32.mrb[0].mxu0
      %v1571 = vpop.f32.mrb[0].mxu0
      %v1572 = vpop.f32.mrb[0].mxu0
      %1573 = vdwg.mxu0
      %s1574 = scalar_lea.vmem %s176, 56
      %v1575 = vld [vmem:[%s1574] sm:$0xf]
      %v1577 = vsel %vm220, %v1575, 0
      %1579 = vmatprep.subr.bf16.mxu0 0
      %1580 = vmatpush1.bf16.msra.mxu0 %v319
      %1581 = vmatprep.subr.bf16.mxu0 0
      %1582 = vmatpush1.bf16.msra.mxu0 0
      %1583 = vmatprep.subr.bf16.mxu0 0
      %1584 = vmatpush1.bf16.msra.mxu0 0
      %1585 = vmatprep.subr.bf16.mxu0 0
      %1586 = vmatpush1.bf16.msra.mxu0 0
      %1587 = vmatprep.subr.bf16.mxu0 0
      %1588 = vmatpush1.bf16.msra.mxu0 0
      %1589 = vmatprep.subr.bf16.mxu0 0
      %1590 = vmatpush1.bf16.msra.mxu0 0
      %1591 = vmatprep.subr.bf16.mxu0 0
      %1592 = vmatpush1.bf16.msra.mxu0 0
      %1593 = vmatprep.subr.bf16.mxu0 0
      %1594 = vmatpush1.bf16.msra.mxu0 0
      %1595 = vmatprep.subr.bf16.mxu0 0
      %1596 = vmatpush1.bf16.msra.mxu0 0
      %1597 = vmatprep.subr.bf16.mxu0 0
      %1598 = vmatpush1.bf16.msra.mxu0 0
      %1599 = vmatprep.subr.bf16.mxu0 0
      %1600 = vmatpush1.bf16.msra.mxu0 0
      %1601 = vmatprep.subr.bf16.mxu0 0
      %1602 = vmatpush1.bf16.msra.mxu0 0
      %1603 = vmatprep.subr.bf16.mxu0 0
      %1604 = vmatpush1.bf16.msra.mxu0 0
      %1605 = vmatprep.subr.bf16.mxu0 0
      %1606 = vmatpush1.bf16.msra.mxu0 0
      %1607 = vmatprep.subr.bf16.mxu0 0
      %1608 = vmatpush1.bf16.msra.mxu0 0
      %1609 = vmatprep.subr.bf16.mxu0 0
      %1610 = vmatpush1.bf16.msra.mxu0 0
      %1611 = vmatprep.mubr.bf16.mxu0 0
      %1612 = vmatmul.mubr.bf16.gmra.mrb[0].mxu0 %v1577
      %v1613 = vpop.f32.mrb[0].mxu0
      %v1614 = vadd.f32 0.0, %v1613
      %v1615 = vpop.f32.mrb[0].mxu0
      %v1616 = vpop.f32.mrb[0].mxu0
      %v1617 = vpop.f32.mrb[0].mxu0
      %1618 = vdwg.mxu0
      %v1619 = vadd.f32 %v1569, %v1614
      %v1620 = vld [vmem:[%s1574] sm:$0xf]
      %v1621 = vld [vmem:[%s1574 + $0x4] sm:$0x1]
      %v1624 = vunpack.c.l.b16 %v1620
      %v1625 = vunpack.c.l.b16 %v1621
      %v1626 = vpack.c.b16 %v1625, %v1624
      %v1628 = vshrl.u32 %v1626, 16
      %v1630 = vshll.u32 %v1626, 16
      %v1632 = vrot.slane %v1630, 1
      %v1633 = vor.u32 %v1628, %v1632
      %v1635 = vsel %vm220, %v1633, 0
      %1637 = vmatprep.subr.bf16.mxu0 0
      %1638 = vmatpush1.bf16.msra.mxu0 %v383
      %1639 = vmatprep.subr.bf16.mxu0 0
      %1640 = vmatpush1.bf16.msra.mxu0 0
      %1641 = vmatprep.subr.bf16.mxu0 0
      %1642 = vmatpush1.bf16.msra.mxu0 0
      %1643 = vmatprep.subr.bf16.mxu0 0
      %1644 = vmatpush1.bf16.msra.mxu0 0
      %1645 = vmatprep.subr.bf16.mxu0 0
      %1646 = vmatpush1.bf16.msra.mxu0 0
      %1647 = vmatprep.subr.bf16.mxu0 0
      %1648 = vmatpush1.bf16.msra.mxu0 0
      %1649 = vmatprep.subr.bf16.mxu0 0
      %1650 = vmatpush1.bf16.msra.mxu0 0
      %1651 = vmatprep.subr.bf16.mxu0 0
      %1652 = vmatpush1.bf16.msra.mxu0 0
      %1653 = vmatprep.subr.bf16.mxu0 0
      %1654 = vmatpush1.bf16.msra.mxu0 0
      %1655 = vmatprep.subr.bf16.mxu0 0
      %1656 = vmatpush1.bf16.msra.mxu0 0
      %1657 = vmatprep.subr.bf16.mxu0 0
      %1658 = vmatpush1.bf16.msra.mxu0 0
      %1659 = vmatprep.subr.bf16.mxu0 0
      %1660 = vmatpush1.bf16.msra.mxu0 0
      %1661 = vmatprep.subr.bf16.mxu0 0
      %1662 = vmatpush1.bf16.msra.mxu0 0
      %1663 = vmatprep.subr.bf16.mxu0 0
      %1664 = vmatpush1.bf16.msra.mxu0 0
      %1665 = vmatprep.subr.bf16.mxu0 0
      %1666 = vmatpush1.bf16.msra.mxu0 0
      %1667 = vmatprep.subr.bf16.mxu0 0
      %1668 = vmatpush1.bf16.msra.mxu0 0
      %1669 = vmatprep.mubr.bf16.mxu0 0
      %1670 = vmatmul.mubr.bf16.gmra.mrb[0].mxu0 %v1635
      %v1671 = vpop.f32.mrb[0].mxu0
      %v1672 = vadd.f32 0.0, %v1671
      %v1673 = vpop.f32.mrb[0].mxu0
      %v1674 = vpop.f32.mrb[0].mxu0
      %v1675 = vpop.f32.mrb[0].mxu0
      %1676 = vdwg.mxu0
      %v1677 = vadd.f32 %v1619, %v1672
      %1678 = vst.msk [vmem:[%s182 + $0x30] sm:$0xff] %vm429, %v1677
      %v1679 = vadd.f32 %v1471, %v1677
      %v1680 = vmul.f32 %v1677, %v1677
      %v1681 = vadd.f32 %v1473, %v1680
      %v1682 = vld [vmem:[%s1574] sm:$0xf]
      %v1683 = vld [vmem:[%s1574 + $0x4] sm:$0x1]
      %v1686 = vunpack.c.l.b16 %v1682
      %v1687 = vunpack.c.l.b16 %v1683
      %v1688 = vpack.c.b16 %v1687, %v1686
      %v1690 = vshrl.u32 %v1688, 16
      %v1692 = vshll.u32 %v1688, 16
      %v1694 = vrot.slane %v1692, 1
      %v1695 = vor.u32 %v1690, %v1694
      %v1697 = vsel %vm220, %v1695, 0
      %1699 = vmatprep.subr.bf16.mxu0 0
      %1700 = vmatpush1.bf16.msra.mxu0 %v218
      %1701 = vmatprep.subr.bf16.mxu0 0
      %1702 = vmatpush1.bf16.msra.mxu0 0
      %1703 = vmatprep.subr.bf16.mxu0 0
      %1704 = vmatpush1.bf16.msra.mxu0 0
      %1705 = vmatprep.subr.bf16.mxu0 0
      %1706 = vmatpush1.bf16.msra.mxu0 0
      %1707 = vmatprep.subr.bf16.mxu0 0
      %1708 = vmatpush1.bf16.msra.mxu0 0
      %1709 = vmatprep.subr.bf16.mxu0 0
      %1710 = vmatpush1.bf16.msra.mxu0 0
      %1711 = vmatprep.subr.bf16.mxu0 0
      %1712 = vmatpush1.bf16.msra.mxu0 0
      %1713 = vmatprep.subr.bf16.mxu0 0
      %1714 = vmatpush1.bf16.msra.mxu0 0
      %1715 = vmatprep.subr.bf16.mxu0 0
      %1716 = vmatpush1.bf16.msra.mxu0 0
      %1717 = vmatprep.subr.bf16.mxu0 0
      %1718 = vmatpush1.bf16.msra.mxu0 0
      %1719 = vmatprep.subr.bf16.mxu0 0
      %1720 = vmatpush1.bf16.msra.mxu0 0
      %1721 = vmatprep.subr.bf16.mxu0 0
      %1722 = vmatpush1.bf16.msra.mxu0 0
      %1723 = vmatprep.subr.bf16.mxu0 0
      %1724 = vmatpush1.bf16.msra.mxu0 0
      %1725 = vmatprep.subr.bf16.mxu0 0
      %1726 = vmatpush1.bf16.msra.mxu0 0
      %1727 = vmatprep.subr.bf16.mxu0 0
      %1728 = vmatpush1.bf16.msra.mxu0 0
      %1729 = vmatprep.subr.bf16.mxu0 0
      %1730 = vmatpush1.bf16.msra.mxu0 0
      %1731 = vmatprep.mubr.bf16.mxu0 0
      %1732 = vmatmul.mubr.bf16.gmra.mrb[0].mxu0 %v1697
      %v1733 = vpop.f32.mrb[0].mxu0
      %v1734 = vadd.f32 0.0, %v1733
      %v1735 = vpop.f32.mrb[0].mxu0
      %v1736 = vpop.f32.mrb[0].mxu0
      %v1737 = vpop.f32.mrb[0].mxu0
      %1738 = vdwg.mxu0
      %v1740 = vsel %vm220, %v1682, 0
      %1742 = vmatprep.subr.bf16.mxu0 0
      %1743 = vmatpush1.bf16.msra.mxu0 %v268
      %1744 = vmatprep.subr.bf16.mxu0 0
      %1745 = vmatpush1.bf16.msra.mxu0 0
      %1746 = vmatprep.subr.bf16.mxu0 0
      %1747 = vmatpush1.bf16.msra.mxu0 0
      %1748 = vmatprep.subr.bf16.mxu0 0
      %1749 = vmatpush1.bf16.msra.mxu0 0
      %1750 = vmatprep.subr.bf16.mxu0 0
      %1751 = vmatpush1.bf16.msra.mxu0 0
      %1752 = vmatprep.subr.bf16.mxu0 0
      %1753 = vmatpush1.bf16.msra.mxu0 0
      %1754 = vmatprep.subr.bf16.mxu0 0
      %1755 = vmatpush1.bf16.msra.mxu0 0
      %1756 = vmatprep.subr.bf16.mxu0 0
      %1757 = vmatpush1.bf16.msra.mxu0 0
      %1758 = vmatprep.subr.bf16.mxu0 0
      %1759 = vmatpush1.bf16.msra.mxu0 0
      %1760 = vmatprep.subr.bf16.mxu0 0
      %1761 = vmatpush1.bf16.msra.mxu0 0
      %1762 = vmatprep.subr.bf16.mxu0 0
      %1763 = vmatpush1.bf16.msra.mxu0 0
      %1764 = vmatprep.subr.bf16.mxu0 0
      %1765 = vmatpush1.bf16.msra.mxu0 0
      %1766 = vmatprep.subr.bf16.mxu0 0
      %1767 = vmatpush1.bf16.msra.mxu0 0
      %1768 = vmatprep.subr.bf16.mxu0 0
      %1769 = vmatpush1.bf16.msra.mxu0 0
      %1770 = vmatprep.subr.bf16.mxu0 0
      %1771 = vmatpush1.bf16.msra.mxu0 0
      %1772 = vmatprep.subr.bf16.mxu0 0
      %1773 = vmatpush1.bf16.msra.mxu0 0
      %1774 = vmatprep.mubr.bf16.mxu0 0
      %1775 = vmatmul.mubr.bf16.gmra.mrb[0].mxu0 %v1740
      %v1776 = vpop.f32.mrb[0].mxu0
      %v1777 = vadd.f32 %v1734, %v1776
      %v1778 = vpop.f32.mrb[0].mxu0
      %v1779 = vpop.f32.mrb[0].mxu0
      %v1780 = vpop.f32.mrb[0].mxu0
      %1781 = vdwg.mxu0
      %s1782 = scalar_lea.vmem %s176, 64
      %v1783 = vld [vmem:[%s1782] sm:$0xf]
      %v1785 = vsel %vm220, %v1783, 0
      %1787 = vmatprep.subr.bf16.mxu0 0
      %1788 = vmatpush1.bf16.msra.mxu0 %v319
      %1789 = vmatprep.subr.bf16.mxu0 0
      %1790 = vmatpush1.bf16.msra.mxu0 0
      %1791 = vmatprep.subr.bf16.mxu0 0
      %1792 = vmatpush1.bf16.msra.mxu0 0
      %1793 = vmatprep.subr.bf16.mxu0 0
      %1794 = vmatpush1.bf16.msra.mxu0 0
      %1795 = vmatprep.subr.bf16.mxu0 0
      %1796 = vmatpush1.bf16.msra.mxu0 0
      %1797 = vmatprep.subr.bf16.mxu0 0
      %1798 = vmatpush1.bf16.msra.mxu0 0
      %1799 = vmatprep.subr.bf16.mxu0 0
      %1800 = vmatpush1.bf16.msra.mxu0 0
      %1801 = vmatprep.subr.bf16.mxu0 0
      %1802 = vmatpush1.bf16.msra.mxu0 0
      %1803 = vmatprep.subr.bf16.mxu0 0
      %1804 = vmatpush1.bf16.msra.mxu0 0
      %1805 = vmatprep.subr.bf16.mxu0 0
      %1806 = vmatpush1.bf16.msra.mxu0 0
      %1807 = vmatprep.subr.bf16.mxu0 0
      %1808 = vmatpush1.bf16.msra.mxu0 0
      %1809 = vmatprep.subr.bf16.mxu0 0
      %1810 = vmatpush1.bf16.msra.mxu0 0
      %1811 = vmatprep.subr.bf16.mxu0 0
      %1812 = vmatpush1.bf16.msra.mxu0 0
      %1813 = vmatprep.subr.bf16.mxu0 0
      %1814 = vmatpush1.bf16.msra.mxu0 0
      %1815 = vmatprep.subr.bf16.mxu0 0
      %1816 = vmatpush1.bf16.msra.mxu0 0
      %1817 = vmatprep.subr.bf16.mxu0 0
      %1818 = vmatpush1.bf16.msra.mxu0 0
      %1819 = vmatprep.mubr.bf16.mxu0 0
      %1820 = vmatmul.mubr.bf16.gmra.mrb[0].mxu0 %v1785
      %v1821 = vpop.f32.mrb[0].mxu0
      %v1822 = vadd.f32 0.0, %v1821
      %v1823 = vpop.f32.mrb[0].mxu0
      %v1824 = vpop.f32.mrb[0].mxu0
      %v1825 = vpop.f32.mrb[0].mxu0
      %1826 = vdwg.mxu0
      %v1827 = vadd.f32 %v1777, %v1822
      %v1828 = vld [vmem:[%s1782] sm:$0xf]
      %v1829 = vld [vmem:[%s1782 + $0x4] sm:$0x1]
      %v1832 = vunpack.c.l.b16 %v1828
      %v1833 = vunpack.c.l.b16 %v1829
      %v1834 = vpack.c.b16 %v1833, %v1832
      %v1836 = vshrl.u32 %v1834, 16
      %v1838 = vshll.u32 %v1834, 16
      %v1840 = vrot.slane %v1838, 1
      %v1841 = vor.u32 %v1836, %v1840
      %v1843 = vsel %vm220, %v1841, 0
      %1845 = vmatprep.subr.bf16.mxu0 0
      %1846 = vmatpush1.bf16.msra.mxu0 %v383
      %1847 = vmatprep.subr.bf16.mxu0 0
      %1848 = vmatpush1.bf16.msra.mxu0 0
      %1849 = vmatprep.subr.bf16.mxu0 0
      %1850 = vmatpush1.bf16.msra.mxu0 0
      %1851 = vmatprep.subr.bf16.mxu0 0
      %1852 = vmatpush1.bf16.msra.mxu0 0
      %1853 = vmatprep.subr.bf16.mxu0 0
      %1854 = vmatpush1.bf16.msra.mxu0 0
      %1855 = vmatprep.subr.bf16.mxu0 0
      %1856 = vmatpush1.bf16.msra.mxu0 0
      %1857 = vmatprep.subr.bf16.mxu0 0
      %1858 = vmatpush1.bf16.msra.mxu0 0
      %1859 = vmatprep.subr.bf16.mxu0 0
      %1860 = vmatpush1.bf16.msra.mxu0 0
      %1861 = vmatprep.subr.bf16.mxu0 0
      %1862 = vmatpush1.bf16.msra.mxu0 0
      %1863 = vmatprep.subr.bf16.mxu0 0
      %1864 = vmatpush1.bf16.msra.mxu0 0
      %1865 = vmatprep.subr.bf16.mxu0 0
      %1866 = vmatpush1.bf16.msra.mxu0 0
      %1867 = vmatprep.subr.bf16.mxu0 0
      %1868 = vmatpush1.bf16.msra.mxu0 0
      %1869 = vmatprep.subr.bf16.mxu0 0
      %1870 = vmatpush1.bf16.msra.mxu0 0
      %1871 = vmatprep.subr.bf16.mxu0 0
      %1872 = vmatpush1.bf16.msra.mxu0 0
      %1873 = vmatprep.subr.bf16.mxu0 0
      %1874 = vmatpush1.bf16.msra.mxu0 0
      %1875 = vmatprep.subr.bf16.mxu0 0
      %1876 = vmatpush1.bf16.msra.mxu0 0
      %1877 = vmatprep.mubr.bf16.mxu0 0
      %1878 = vmatmul.mubr.bf16.gmra.mrb[0].mxu0 %v1843
      %v1879 = vpop.f32.mrb[0].mxu0
      %v1880 = vadd.f32 0.0, %v1879
      %v1881 = vpop.f32.mrb[0].mxu0
      %v1882 = vpop.f32.mrb[0].mxu0
      %v1883 = vpop.f32.mrb[0].mxu0
      %1884 = vdwg.mxu0
      %v1885 = vadd.f32 %v1827, %v1880
      %1886 = vst.msk [vmem:[%s182 + $0x38] sm:$0xff] %vm429, %v1885
      %v1887 = vadd.f32 %v1679, %v1885
      %v1888 = vmul.f32 %v1885, %v1885
      %v1889 = vadd.f32 %v1681, %v1888
      %1890 = vst.msk [vmem:[%s187] sm:$0xff] %vm429, 0.0
      %v1891 = vsel %vm429, %v1887, 0.0
      %v1892 = vrot.slane %v1891, 4
      %v1893 = vadd.f32 %v1891, %v1892
      %v1894 = vrot.slane %v1893, 2
      %v1895 = vadd.f32 %v1893, %v1894
      %v1896 = vrot.slane %v1895, 1
      %v1897 = vadd.f32 %v1895, %v1896
      %vm1898 = vcmask 57344
      %1899 = vst.msk [vmem:[%s187] sm:$0x1] %vm1898, %v1897
      %v1900 = vsel %vm429, %v1889, 0.0
      %v1901 = vrot.slane %v1900, 4
      %v1902 = vadd.f32 %v1900, %v1901
      %v1903 = vrot.slane %v1902, 2
      %v1904 = vadd.f32 %v1902, %v1903
      %v1905 = vrot.slane %v1904, 1
      %v1906 = vadd.f32 %v1904, %v1905
      %1907 = vst.msk [vmem:[%s187 + $0x1] sm:$0x1] %vm1898, %v1906
      %s1908 = smul.u32 8, %s15
      %p1909 = scmp.lt.s32.totalorder %s1908, 15
      %s1910 = scalar_select %p1909, %s1908, 15
      %s1911 = smul.addr %s1910, 8
      %s1912 = scalar_lea.vmem %s2, %s1911
      %p1913 = scmp.lt.s32.totalorder %s15, 1
      %s1914 = scalar_select %p1913, %s15, 1
      %s1915 = smul.addr %s1914, 8
      %s1916 = scalar_lea.vmem %s3, %s1915
      // Predicated region
      $region29: #{down_conv_forward.2} parent=27 // pred_check
        %p1917 = pneg %p80
      $region30: #{down_conv_forward.2} parent=27 // pred_check_branch
        %1919 = sbr.rel (%p1917) target = $region32
      $region31: #{down_conv_forward.2} parent=27 // pred_region
        %s1920 = smul.u32 8, %s15
      $region32: #{down_conv_forward.2} parent=27 // pred_fallthru
        _
      // Predicated region
      $region33: #{down_conv_forward.2} parent=27 // pred_check
        %p1921 = pneg %p106
      $region34: #{down_conv_forward.2} parent=27 // pred_check_branch
        %1923 = sbr.rel (%p1921) target = $region36
      $region35: #{down_conv_forward.2} parent=27 // pred_region
        _
      $region36: #{down_conv_forward.2} parent=27 // pred_fallthru
        _
    $region28: #{down_conv_forward.2} parent=5 // pred_fallthru
      _
    %p1924 = scmp.le.s32.totalorder 2, %s10
    // Predicated region
    $region37: #{down_conv_forward.2} parent=5 // pred_check
      %p1925 = pneg %p1924
    $region38: #{down_conv_forward.2} parent=5 // pred_check_branch
      %1927 = sbr.rel (%p1925) target = $region40
    $region39: #{down_conv_forward.2} parent=5 // pred_region
      %s1928 = ssub.s32 %s10, 2
      // Predicated region
      $region41: #{down_conv_forward.2} parent=39 // pred_check
        %p1929 = pneg %p86
      $region42: #{down_conv_forward.2} parent=39 // pred_check_branch
        %1931 = sbr.rel (%p1929) target = $region44
      $region43: #{down_conv_forward.2} parent=39 // pred_region
        %s1932 = smul.u32 8, %s16
        %p1933 = scmp.lt.s32.totalorder %s1932, 15
        %s1934 = scalar_select %p1933, %s1932, 15
        %s1935 = smul.addr %s1934, 8
        %s1936 = scalar_lea.vmem %s2, %s1935
      $region44: #{down_conv_forward.2} parent=39 // pred_fallthru
        _
      // Predicated region
      $region45: #{down_conv_forward.2} parent=39 // pred_check
        %p1937 = pneg %p112
      $region46: #{down_conv_forward.2} parent=39 // pred_check_branch
        %1939 = sbr.rel (%p1937) target = $region48
      $region47: #{down_conv_forward.2} parent=39 // pred_region
        %p1940 = scmp.lt.s32.totalorder %s16, 1
        %s1941 = scalar_select %p1940, %s16, 1
        %s1942 = smul.addr %s1941, 8
        %s1943 = scalar_lea.vmem %s3, %s1942
      $region48: #{down_conv_forward.2} parent=39 // pred_fallthru
        _
    $region40: #{down_conv_forward.2} parent=5 // pred_fallthru
      _
  $region6: #{down_conv_forward.2} parent=0 // loop_footer
    %s14 = sadd.s32 1, %s10
  $region7: #{down_conv_forward.2} parent=0 // loop_footer_branch
    %9 = sbr.rel target = $region3
  $region8: #{down_conv_forward.2} parent=0 // loop_exit
    _

</llo_original>
